<compile_context>
chip_gen: v7x
topology: tpu7x:2x2x1
jax: 0.10.0
libtpu: 0.0.40
codegen_flags: <defaults>
</compile_context>

<pallas_src>
import jax
import jax.numpy as jnp
import numpy as np
from jax.experimental import pallas as pl
from jax.experimental.pallas import tpu as pltpu

# ---------------- model hyper-parameters (consistent with the module) ---------
B = 2            # batch
CIN = 3          # conv_1_if
K1 = 3           # conv_1_ks
C1 = 8           # conv_1_of
K2 = 3           # conv_2_ks
C2 = 8           # conv_2_of
WIN = 32         # conv_indim (input width), H == 1
POOL = 2         # pool_ks

W1OUT = WIN - (K1 - 1)            # 30
WP1 = W1OUT // POOL               # 15
W2OUT = WP1 - (K2 - 1)            # 13
WP2 = W2OUT // POOL               # 6
F1IN = C2 * WP2                   # fully_1_indim = 48
F1 = 32                           # fully_1_outdim
F2 = 4                            # fully_2_outdim (num classes)

# ---------------- kernel layout geometry --------------------------------------
# conv1 outputs are grouped by phase r = w mod 4 (rows r*BLK1 + BP*i + b hold
# output position w = 4*i + r), conv2 outputs by phase s = w mod 2; the batch
# is the fastest row index, padded from B=2 to BP=8 so every shifted row slice
# used in the kernel is 8-sublane aligned.
BP = 8                            # padded batch-fast stride
P1I = 12                          # padded i-range per conv1 phase
P2J = 8                           # padded j-range per conv2 phase
BLK1 = BP * P1I                   # 96 rows per conv1 phase block
BLK2 = BP * P2J                   # 64 rows per conv2 phase block
WXPAD = 4 * P1I + K1 - 1          # zero-padded input width for im2col = 50
F2PAD = 128                       # lane-padded logits width (lane-dense store)


# ------------------------------- Pallas kernel --------------------------------
def net_kernel(m1_ref, w1_ref, w2_ref, wfc1_ref, wfc2_ref, out_ref):
    """Whole forward pass for the (padded) batch in a single invocation.

    m1_ref  : (4*BLK1, K1*CIN) conv1 im2col (built wrapper-side);
              row r*BLK1 + BP*i + b, lane k*CIN + c == x[b, 4i + r + k, c].
    w1_ref  : (K1*CIN, C1)   conv1 weight, row = k*CIN + c.
    w2_ref  : (K2*C1,  C2)   conv2 weight, row = k*C1  + c.
    wfc1_ref: (F1IN,   F1)   fc1 weight, row = w*C2 + c (w-major flatten).
    wfc2_ref: (F1, F2PAD)    fc2 weight transposed, zero-padded to 128 lanes.
    out_ref : (BP, F2PAD)    logits (rows >= B and lanes >= F2 are padding).

    Rows belonging to padded positions / padded batch entries are computed on
    exact zeros and never read by the valid outputs downstream.
    """
    f32 = jnp.float32

    # ---------------- conv1 : one MXU matmul over the whole batch -----------
    h1 = jnp.dot(m1_ref[...], w1_ref[...], preferred_element_type=f32)

    # -------- max-pool (1,2) fused with ReLU (max commutes with ReLU) -------
    # p1e rows BP*i + b == pool1[b, 2i];  p1o rows == pool1[b, 2i+1]
    p1e = jnp.maximum(jnp.maximum(h1[0:BLK1], h1[BLK1:2 * BLK1]), 0.0)
    p1o = jnp.maximum(jnp.maximum(h1[2 * BLK1:3 * BLK1],
                                  h1[3 * BLK1:4 * BLK1]), 0.0)

    # -------- conv2 : accumulated matmuls over weight row slices ------------
    # (no lane-axis concats; all row slices below are 8-sublane aligned)
    w2 = w2_ref[...]
    p1e0 = p1e[:BLK2]                 # pool1[b, 2j]
    p1o0 = p1o[:BLK2]                 # pool1[b, 2j+1]
    p1es = p1e[BP:BP + BLK2]          # pool1[b, 2j+2]
    p1os = p1o[BP:BP + BLK2]          # pool1[b, 2j+3]
    h2e = (jnp.dot(p1e0, w2[0:C1], preferred_element_type=f32)
           + jnp.dot(p1o0, w2[C1:2 * C1], preferred_element_type=f32)
           + jnp.dot(p1es, w2[2 * C1:3 * C1], preferred_element_type=f32))
    h2o = (jnp.dot(p1o0, w2[0:C1], preferred_element_type=f32)
           + jnp.dot(p1es, w2[C1:2 * C1], preferred_element_type=f32)
           + jnp.dot(p1os, w2[2 * C1:3 * C1], preferred_element_type=f32))

    # -------- max-pool (1,2) fused with ReLU ---------------------------------
    p2 = jnp.maximum(jnp.maximum(h2e, h2o), 0.0)   # rows BP*j + b == pool2[b,j]

    # -------- fc1 : accumulated matmuls (flatten without lane shuffles) ------
    wfc1 = wfc1_ref[...]
    y1 = jnp.dot(p2[0:BP], wfc1[0:C2], preferred_element_type=f32)
    for j in range(1, WP2):
        y1 = y1 + jnp.dot(p2[BP * j:BP * (j + 1)],
                          wfc1[j * C2:(j + 1) * C2],
                          preferred_element_type=f32)
    y1 = jnp.maximum(y1, 0.0)                      # (BP, F1)

    # -------- fc2 : lane-padded weight -> single lane-dense (8,128) store ----
    out_ref[...] = jnp.dot(y1, wfc2_ref[...], preferred_element_type=f32)


# ------------------------------- wrappers --------------------------------------
def prepare_params(w_conv1, w_conv2, w_fc1, w_fc2):
    """One-time weight relayouts (hoisted out of the per-step forward path).
       PyTorch layouts in: w_conv1 (C1,CIN,1,K1), w_conv2 (C2,C1,1,K2),
       w_fc1 (F1,F1IN), w_fc2 (F2,F1)."""
    w1 = jnp.transpose(w_conv1[:, :, 0, :], (2, 1, 0)).reshape(K1 * CIN, C1)
    w2 = jnp.transpose(w_conv2[:, :, 0, :], (2, 1, 0)).reshape(K2 * C1, C2)
    wfc1 = jnp.transpose(w_fc1.reshape(F1, C2, WP2), (2, 1, 0)).reshape(F1IN, F1)
    wfc2 = jnp.zeros((F1, F2PAD), jnp.float32).at[:, :F2].set(jnp.transpose(w_fc2))
    return w1, w2, wfc1, wfc2


@jax.jit
def net_forward(x_nchw, w1, w2, wfc1, wfc2):
    """x_nchw: (B, CIN, 1, WIN) float32; weights pre-transformed by
       prepare_params. Returns logits (B, F2)."""
    # ---- layout plumbing only (fused XLA ops): phase-grouped, batch-padded
    #      conv1 im2col matrix m1[r*BLK1 + BP*i + b, k*CIN + c] = x[b, 4i+r+k, c]
    x_wc = jnp.transpose(x_nchw[:, :, 0, :], (0, 2, 1))            # (B, WIN, CIN)
    x_pad = jnp.pad(x_wc, ((0, BP - B), (0, WXPAD - WIN), (0, 0)))  # (BP,WXPAD,CIN)
    cols = jnp.stack([x_pad[:, k:k + 4 * P1I, :] for k in range(K1)], axis=2)
    m1 = (cols.reshape(BP, P1I, 4, K1 * CIN)
              .transpose(2, 1, 0, 3)
              .reshape(4 * BLK1, K1 * CIN))                        # (384, 9)

    out = pl.pallas_call(
        net_kernel,
        out_shape=jax.ShapeDtypeStruct((BP, F2PAD), jnp.float32),
        in_specs=[pl.BlockSpec(memory_space=pltpu.MemorySpace.VMEM)] * 5,
        out_specs=pl.BlockSpec(memory_space=pltpu.MemorySpace.VMEM),
    )(m1, w1, w2, wfc1, wfc2)
    return out[:B, :F2]


# --------------------------- pure-JAX reference ---------------------------------
def _conv1d_ref(x, w):  # x: (B, C, W), w: (O, C, 1, K)  -> (B, O, Wout)
    K = w.shape[-1]
    Wout = x.shape[-1] - K + 1
    out = jnp.zeros((x.shape[0], w.shape[0], Wout), jnp.float32)
    for k in range(K):
        out = out + jnp.einsum('bcw,oc->bow', x[:, :, k:k + Wout], w[:, :, 0, k])
    return out


def _pool_ref(x):  # (B, C, W) -> (B, C, W//2), floor mode
    Wp = x.shape[-1] // 2
    x = x[:, :, :2 * Wp].reshape(x.shape[0], x.shape[1], Wp, 2)
    return x.max(-1)


def reference_forward(x_nchw, w_conv1, w_conv2, w_fc1, w_fc2):
    h = jnp.maximum(_conv1d_ref(x_nchw[:, :, 0, :], w_conv1), 0.0)
    h = _pool_ref(h)
    h = jnp.maximum(_conv1d_ref(h, w_conv2), 0.0)
    h = _pool_ref(h)
    flat = h.reshape(h.shape[0], -1)          # channel-major == torch flatten(1)
    y = jnp.maximum(flat @ w_fc1.T, 0.0)
    return y @ w_fc2.T


# ------------------------------------ main --------------------------------------
if __name__ == "__main__":
    key = jax.random.PRNGKey(0)
    kx, k1, k2, k3, k4 = jax.random.split(key, 5)

    x = jax.random.normal(kx, (B, CIN, 1, WIN), dtype=jnp.float32)
    w_conv1 = 0.2 * jax.random.normal(k1, (C1, CIN, 1, K1), dtype=jnp.float32)
    w_conv2 = 0.2 * jax.random.normal(k2, (C2, C1, 1, K2), dtype=jnp.float32)
    w_fc1 = 0.1 * jax.random.normal(k3, (F1, F1IN), dtype=jnp.float32)
    w_fc2 = 0.1 * jax.random.normal(k4, (F2, F1), dtype=jnp.float32)

    # one-time weight relayout (not part of the per-step forward path)
    params = prepare_params(w_conv1, w_conv2, w_fc1, w_fc2)

    out = net_forward(x, *params)
    out = jax.block_until_ready(out)

    ref = reference_forward(x, w_conv1, w_conv2, w_fc1, w_fc2)
    np.testing.assert_allclose(np.asarray(out), np.asarray(ref),
                               rtol=1e-4, atol=1e-4)
    assert out.shape == (B, F2)
    print("KERNEL_OK")
</pallas_src>

<mosaic_0001>
module attributes {stable_mosaic.version = 11 : i64} {
  func.func @net_kernel(%arg0: memref<384x9xf32, #tpu.memory_space<vmem>>, %arg1: memref<9x8xf32, #tpu.memory_space<vmem>>, %arg2: memref<24x8xf32, #tpu.memory_space<vmem>>, %arg3: memref<48x32xf32, #tpu.memory_space<vmem>>, %arg4: memref<32x128xf32, #tpu.memory_space<vmem>>, %arg5: memref<8x128xf32, #tpu.memory_space<vmem>>) attributes {dimension_semantics = [], scalar_prefetch = 0 : i64, scratch_operands = 0 : i64, tpu.core_type = #tpu.core_type<tc>} {
    %c0 = arith.constant 0 : index
    %c0_0 = arith.constant 0 : index
    %0 = vector.load %arg0[%c0, %c0_0] : memref<384x9xf32, #tpu.memory_space<vmem>>, vector<384x9xf32>
    %c0_1 = arith.constant 0 : index
    %c0_2 = arith.constant 0 : index
    %1 = vector.load %arg1[%c0_1, %c0_2] : memref<9x8xf32, #tpu.memory_space<vmem>>, vector<9x8xf32>
    %cst = arith.constant dense<0.000000e+00> : vector<384x8xf32>
    %2 = tpu.matmul %0, %1, %cst {dimension_numbers = #tpu.dot_dimension_numbers<[1], [0], [0], [1], [0, 0, 1, 1], [], []>} : vector<384x9xf32>, vector<9x8xf32>, vector<384x8xf32> -> vector<384x8xf32>
    %3 = vector.extract_strided_slice %2 {offsets = [0, 0], sizes = [96, 8], strides = [1, 1]} : vector<384x8xf32> to vector<96x8xf32>
    %4 = vector.extract_strided_slice %2 {offsets = [96, 0], sizes = [96, 8], strides = [1, 1]} : vector<384x8xf32> to vector<96x8xf32>
    %5 = arith.maximumf %3, %4 : vector<96x8xf32>
    %cst_3 = arith.constant 0.000000e+00 : f32
    %6 = vector.broadcast %cst_3 : f32 to vector<96x8xf32>
    %7 = arith.maximumf %5, %6 : vector<96x8xf32>
    %8 = vector.extract_strided_slice %2 {offsets = [192, 0], sizes = [96, 8], strides = [1, 1]} : vector<384x8xf32> to vector<96x8xf32>
    %9 = vector.extract_strided_slice %2 {offsets = [288, 0], sizes = [96, 8], strides = [1, 1]} : vector<384x8xf32> to vector<96x8xf32>
    %10 = arith.maximumf %8, %9 : vector<96x8xf32>
    %cst_4 = arith.constant 0.000000e+00 : f32
    %11 = vector.broadcast %cst_4 : f32 to vector<96x8xf32>
    %12 = arith.maximumf %10, %11 : vector<96x8xf32>
    %c0_5 = arith.constant 0 : index
    %c0_6 = arith.constant 0 : index
    %13 = vector.load %arg2[%c0_5, %c0_6] : memref<24x8xf32, #tpu.memory_space<vmem>>, vector<24x8xf32>
    %14 = vector.extract_strided_slice %7 {offsets = [0, 0], sizes = [64, 8], strides = [1, 1]} : vector<96x8xf32> to vector<64x8xf32>
    %15 = vector.extract_strided_slice %12 {offsets = [0, 0], sizes = [64, 8], strides = [1, 1]} : vector<96x8xf32> to vector<64x8xf32>
    %16 = vector.extract_strided_slice %7 {offsets = [8, 0], sizes = [64, 8], strides = [1, 1]} : vector<96x8xf32> to vector<64x8xf32>
    %17 = vector.extract_strided_slice %12 {offsets = [8, 0], sizes = [64, 8], strides = [1, 1]} : vector<96x8xf32> to vector<64x8xf32>
    %18 = vector.extract_strided_slice %13 {offsets = [0, 0], sizes = [8, 8], strides = [1, 1]} : vector<24x8xf32> to vector<8x8xf32>
    %cst_7 = arith.constant dense<0.000000e+00> : vector<64x8xf32>
    %19 = tpu.matmul %14, %18, %cst_7 {dimension_numbers = #tpu.dot_dimension_numbers<[1], [0], [0], [1], [0, 0, 1, 1], [], []>} : vector<64x8xf32>, vector<8x8xf32>, vector<64x8xf32> -> vector<64x8xf32>
    %20 = vector.extract_strided_slice %13 {offsets = [8, 0], sizes = [8, 8], strides = [1, 1]} : vector<24x8xf32> to vector<8x8xf32>
    %cst_8 = arith.constant dense<0.000000e+00> : vector<64x8xf32>
    %21 = tpu.matmul %15, %20, %cst_8 {dimension_numbers = #tpu.dot_dimension_numbers<[1], [0], [0], [1], [0, 0, 1, 1], [], []>} : vector<64x8xf32>, vector<8x8xf32>, vector<64x8xf32> -> vector<64x8xf32>
    %22 = arith.addf %19, %21 : vector<64x8xf32>
    %23 = vector.extract_strided_slice %13 {offsets = [16, 0], sizes = [8, 8], strides = [1, 1]} : vector<24x8xf32> to vector<8x8xf32>
    %cst_9 = arith.constant dense<0.000000e+00> : vector<64x8xf32>
    %24 = tpu.matmul %16, %23, %cst_9 {dimension_numbers = #tpu.dot_dimension_numbers<[1], [0], [0], [1], [0, 0, 1, 1], [], []>} : vector<64x8xf32>, vector<8x8xf32>, vector<64x8xf32> -> vector<64x8xf32>
    %25 = arith.addf %22, %24 : vector<64x8xf32>
    %26 = vector.extract_strided_slice %13 {offsets = [0, 0], sizes = [8, 8], strides = [1, 1]} : vector<24x8xf32> to vector<8x8xf32>
    %cst_10 = arith.constant dense<0.000000e+00> : vector<64x8xf32>
    %27 = tpu.matmul %15, %26, %cst_10 {dimension_numbers = #tpu.dot_dimension_numbers<[1], [0], [0], [1], [0, 0, 1, 1], [], []>} : vector<64x8xf32>, vector<8x8xf32>, vector<64x8xf32> -> vector<64x8xf32>
    %28 = vector.extract_strided_slice %13 {offsets = [8, 0], sizes = [8, 8], strides = [1, 1]} : vector<24x8xf32> to vector<8x8xf32>
    %cst_11 = arith.constant dense<0.000000e+00> : vector<64x8xf32>
    %29 = tpu.matmul %16, %28, %cst_11 {dimension_numbers = #tpu.dot_dimension_numbers<[1], [0], [0], [1], [0, 0, 1, 1], [], []>} : vector<64x8xf32>, vector<8x8xf32>, vector<64x8xf32> -> vector<64x8xf32>
    %30 = arith.addf %27, %29 : vector<64x8xf32>
    %31 = vector.extract_strided_slice %13 {offsets = [16, 0], sizes = [8, 8], strides = [1, 1]} : vector<24x8xf32> to vector<8x8xf32>
    %cst_12 = arith.constant dense<0.000000e+00> : vector<64x8xf32>
    %32 = tpu.matmul %17, %31, %cst_12 {dimension_numbers = #tpu.dot_dimension_numbers<[1], [0], [0], [1], [0, 0, 1, 1], [], []>} : vector<64x8xf32>, vector<8x8xf32>, vector<64x8xf32> -> vector<64x8xf32>
    %33 = arith.addf %30, %32 : vector<64x8xf32>
    %34 = arith.maximumf %25, %33 : vector<64x8xf32>
    %cst_13 = arith.constant 0.000000e+00 : f32
    %35 = vector.broadcast %cst_13 : f32 to vector<64x8xf32>
    %36 = arith.maximumf %34, %35 : vector<64x8xf32>
    %c0_14 = arith.constant 0 : index
    %c0_15 = arith.constant 0 : index
    %37 = vector.load %arg3[%c0_14, %c0_15] : memref<48x32xf32, #tpu.memory_space<vmem>>, vector<48x32xf32>
    %38 = vector.extract_strided_slice %36 {offsets = [0, 0], sizes = [8, 8], strides = [1, 1]} : vector<64x8xf32> to vector<8x8xf32>
    %39 = vector.extract_strided_slice %37 {offsets = [0, 0], sizes = [8, 32], strides = [1, 1]} : vector<48x32xf32> to vector<8x32xf32>
    %cst_16 = arith.constant dense<0.000000e+00> : vector<8x32xf32>
    %40 = tpu.matmul %38, %39, %cst_16 {dimension_numbers = #tpu.dot_dimension_numbers<[1], [0], [0], [1], [0, 0, 1, 1], [], []>} : vector<8x8xf32>, vector<8x32xf32>, vector<8x32xf32> -> vector<8x32xf32>
    %41 = vector.extract_strided_slice %36 {offsets = [8, 0], sizes = [8, 8], strides = [1, 1]} : vector<64x8xf32> to vector<8x8xf32>
    %42 = vector.extract_strided_slice %37 {offsets = [8, 0], sizes = [8, 32], strides = [1, 1]} : vector<48x32xf32> to vector<8x32xf32>
    %cst_17 = arith.constant dense<0.000000e+00> : vector<8x32xf32>
    %43 = tpu.matmul %41, %42, %cst_17 {dimension_numbers = #tpu.dot_dimension_numbers<[1], [0], [0], [1], [0, 0, 1, 1], [], []>} : vector<8x8xf32>, vector<8x32xf32>, vector<8x32xf32> -> vector<8x32xf32>
    %44 = arith.addf %40, %43 : vector<8x32xf32>
    %45 = vector.extract_strided_slice %36 {offsets = [16, 0], sizes = [8, 8], strides = [1, 1]} : vector<64x8xf32> to vector<8x8xf32>
    %46 = vector.extract_strided_slice %37 {offsets = [16, 0], sizes = [8, 32], strides = [1, 1]} : vector<48x32xf32> to vector<8x32xf32>
    %cst_18 = arith.constant dense<0.000000e+00> : vector<8x32xf32>
    %47 = tpu.matmul %45, %46, %cst_18 {dimension_numbers = #tpu.dot_dimension_numbers<[1], [0], [0], [1], [0, 0, 1, 1], [], []>} : vector<8x8xf32>, vector<8x32xf32>, vector<8x32xf32> -> vector<8x32xf32>
    %48 = arith.addf %44, %47 : vector<8x32xf32>
    %49 = vector.extract_strided_slice %36 {offsets = [24, 0], sizes = [8, 8], strides = [1, 1]} : vector<64x8xf32> to vector<8x8xf32>
    %50 = vector.extract_strided_slice %37 {offsets = [24, 0], sizes = [8, 32], strides = [1, 1]} : vector<48x32xf32> to vector<8x32xf32>
    %cst_19 = arith.constant dense<0.000000e+00> : vector<8x32xf32>
    %51 = tpu.matmul %49, %50, %cst_19 {dimension_numbers = #tpu.dot_dimension_numbers<[1], [0], [0], [1], [0, 0, 1, 1], [], []>} : vector<8x8xf32>, vector<8x32xf32>, vector<8x32xf32> -> vector<8x32xf32>
    %52 = arith.addf %48, %51 : vector<8x32xf32>
    %53 = vector.extract_strided_slice %36 {offsets = [32, 0], sizes = [8, 8], strides = [1, 1]} : vector<64x8xf32> to vector<8x8xf32>
    %54 = vector.extract_strided_slice %37 {offsets = [32, 0], sizes = [8, 32], strides = [1, 1]} : vector<48x32xf32> to vector<8x32xf32>
    %cst_20 = arith.constant dense<0.000000e+00> : vector<8x32xf32>
    %55 = tpu.matmul %53, %54, %cst_20 {dimension_numbers = #tpu.dot_dimension_numbers<[1], [0], [0], [1], [0, 0, 1, 1], [], []>} : vector<8x8xf32>, vector<8x32xf32>, vector<8x32xf32> -> vector<8x32xf32>
    %56 = arith.addf %52, %55 : vector<8x32xf32>
    %57 = vector.extract_strided_slice %36 {offsets = [40, 0], sizes = [8, 8], strides = [1, 1]} : vector<64x8xf32> to vector<8x8xf32>
    %58 = vector.extract_strided_slice %37 {offsets = [40, 0], sizes = [8, 32], strides = [1, 1]} : vector<48x32xf32> to vector<8x32xf32>
    %cst_21 = arith.constant dense<0.000000e+00> : vector<8x32xf32>
    %59 = tpu.matmul %57, %58, %cst_21 {dimension_numbers = #tpu.dot_dimension_numbers<[1], [0], [0], [1], [0, 0, 1, 1], [], []>} : vector<8x8xf32>, vector<8x32xf32>, vector<8x32xf32> -> vector<8x32xf32>
    %60 = arith.addf %56, %59 : vector<8x32xf32>
    %cst_22 = arith.constant 0.000000e+00 : f32
    %61 = vector.broadcast %cst_22 : f32 to vector<8x32xf32>
    %62 = arith.maximumf %60, %61 : vector<8x32xf32>
    %c0_23 = arith.constant 0 : index
    %c0_24 = arith.constant 0 : index
    %63 = vector.load %arg4[%c0_23, %c0_24] : memref<32x128xf32, #tpu.memory_space<vmem>>, vector<32x128xf32>
    %cst_25 = arith.constant dense<0.000000e+00> : vector<8x128xf32>
    %64 = tpu.matmul %62, %63, %cst_25 {dimension_numbers = #tpu.dot_dimension_numbers<[1], [0], [0], [1], [0, 0, 1, 1], [], []>} : vector<8x32xf32>, vector<32x128xf32>, vector<8x128xf32> -> vector<8x128xf32>
    %c0_26 = arith.constant 0 : index
    %c0_27 = arith.constant 0 : index
    %65 = vector.load %arg5[%c0_26, %c0_27] : memref<8x128xf32, #tpu.memory_space<vmem>>, vector<8x128xf32>
    tpu.vector_store %arg5[%c0_26, %c0_27], %64 {strides = array<i32>} : memref<8x128xf32, #tpu.memory_space<vmem>>, vector<8x128xf32>,
    return
  }
}

</mosaic_0001>

<llo_original>
// kernel: net_forward.1
$region0: #{net_forward.1}
  #allocation0 [shape = 'u32[]', space=smem, size = 0x4, offset = 0x4, fixed_abs, tag = 'smem constant byte address 0x4 - core index']
  #allocation1 [shape = 'u32[144,128]{1,0:T(1,128)}', space=vmem, size = 0x12000, scoped, tag = 'internal scratch']
  %s0 = inlined_call_operand.vmem [shape: f32[384,9], index: 0, kind: input, shape index: {}]
  %s1 = inlined_call_operand.vmem [shape: f32[9,8], index: 1, kind: input, shape index: {}]
  %s2 = inlined_call_operand.vmem [shape: f32[24,8], index: 2, kind: input, shape index: {}]
  %s3 = inlined_call_operand.vmem [shape: f32[48,32], index: 3, kind: input, shape index: {}]
  %s4 = inlined_call_operand.vmem [shape: f32[32,128], index: 4, kind: input, shape index: {}]
  %s5 = inlined_call_operand.vmem [shape: f32[8,128], index: 5, kind: output, shape index: {}]
  %s6 = sld [smem:[#allocation0]]
  $region30: #{net_forward.1} parent=0
    _
  %s8 = ssub.s32 1, %s6
  %s9 = scalar_select 0, %s8, %s6
  // Predicated region
  $region2: #{net_forward.1} parent=0 // pred_check
    _
  $region3: #{net_forward.1} parent=0 // pred_check_branch
    %11 = sbr.rel (0) target = $region5
  $region4: #{net_forward.1} parent=0 // pred_region
    _
  $region5: #{net_forward.1} parent=0 // pred_fallthru
    _
  // Predicated region
  $region6: #{net_forward.1} parent=0 // pred_check
    _
  $region7: #{net_forward.1} parent=0 // pred_check_branch
    %13 = sbr.rel (0) target = $region9
  $region8: #{net_forward.1} parent=0 // pred_region
    _
  $region9: #{net_forward.1} parent=0 // pred_fallthru
    _
  // Predicated region
  $region10: #{net_forward.1} parent=0 // pred_check
    _
  $region11: #{net_forward.1} parent=0 // pred_check_branch
    %15 = sbr.rel (0) target = $region13
  $region12: #{net_forward.1} parent=0 // pred_region
    _
  $region13: #{net_forward.1} parent=0 // pred_fallthru
    _
  // Predicated region
  $region14: #{net_forward.1} parent=0 // pred_check
    _
  $region15: #{net_forward.1} parent=0 // pred_check_branch
    %17 = sbr.rel (0) target = $region17
  $region16: #{net_forward.1} parent=0 // pred_region
    _
  $region17: #{net_forward.1} parent=0 // pred_fallthru
    _
  // Predicated region
  $region18: #{net_forward.1} parent=0 // pred_check
    _
  $region19: #{net_forward.1} parent=0 // pred_check_branch
    %19 = sbr.rel (0) target = $region21
  $region20: #{net_forward.1} parent=0 // pred_region
    _
  $region21: #{net_forward.1} parent=0 // pred_fallthru
    _
  %v20 = vld [vmem:[%s0] sm:$0xff]
  %v21 = vld [vmem:[%s0 + $0x8] sm:$0xff]
  %v22 = vld [vmem:[%s0 + $0x10] sm:$0xff]
  %v23 = vld [vmem:[%s0 + $0x18] sm:$0xff]
  %v24 = vld [vmem:[%s0 + $0x20] sm:$0xff]
  %v25 = vld [vmem:[%s0 + $0x28] sm:$0xff]
  %v26 = vld [vmem:[%s0 + $0x30] sm:$0xff]
  %v27 = vld [vmem:[%s0 + $0x38] sm:$0xff]
  %v28 = vld [vmem:[%s0 + $0x40] sm:$0xff]
  %v29 = vld [vmem:[%s0 + $0x48] sm:$0xff]
  %v30 = vld [vmem:[%s0 + $0x50] sm:$0xff]
  %v31 = vld [vmem:[%s0 + $0x58] sm:$0xff]
  %v32 = vld [vmem:[%s0 + $0x60] sm:$0xff]
  %v33 = vld [vmem:[%s0 + $0x68] sm:$0xff]
  %v34 = vld [vmem:[%s0 + $0x70] sm:$0xff]
  %v35 = vld [vmem:[%s0 + $0x78] sm:$0xff]
  %v36 = vld [vmem:[%s0 + $0x80] sm:$0xff]
  %v37 = vld [vmem:[%s0 + $0x88] sm:$0xff]
  %v38 = vld [vmem:[%s0 + $0x90] sm:$0xff]
  %v39 = vld [vmem:[%s0 + $0x98] sm:$0xff]
  %v40 = vld [vmem:[%s0 + $0xa0] sm:$0xff]
  %v41 = vld [vmem:[%s0 + $0xa8] sm:$0xff]
  %v42 = vld [vmem:[%s0 + $0xb0] sm:$0xff]
  %v43 = vld [vmem:[%s0 + $0xb8] sm:$0xff]
  %v44 = vld [vmem:[%s0 + $0xc0] sm:$0xff]
  %v45 = vld [vmem:[%s0 + $0xc8] sm:$0xff]
  %v46 = vld [vmem:[%s0 + $0xd0] sm:$0xff]
  %v47 = vld [vmem:[%s0 + $0xd8] sm:$0xff]
  %v48 = vld [vmem:[%s0 + $0xe0] sm:$0xff]
  %v49 = vld [vmem:[%s0 + $0xe8] sm:$0xff]
  %v50 = vld [vmem:[%s0 + $0xf0] sm:$0xff]
  %v51 = vld [vmem:[%s0 + $0xf8] sm:$0xff]
  %v52 = vld [vmem:[%s0 + $0x100] sm:$0xff]
  %v53 = vld [vmem:[%s0 + $0x108] sm:$0xff]
  %v54 = vld [vmem:[%s0 + $0x110] sm:$0xff]
  %v55 = vld [vmem:[%s0 + $0x118] sm:$0xff]
  %v56 = vld [vmem:[%s0 + $0x120] sm:$0xff]
  %v57 = vld [vmem:[%s0 + $0x128] sm:$0xff]
  %v58 = vld [vmem:[%s0 + $0x130] sm:$0xff]
  %v59 = vld [vmem:[%s0 + $0x138] sm:$0xff]
  %v60 = vld [vmem:[%s0 + $0x140] sm:$0xff]
  %v61 = vld [vmem:[%s0 + $0x148] sm:$0xff]
  %v62 = vld [vmem:[%s0 + $0x150] sm:$0xff]
  %v63 = vld [vmem:[%s0 + $0x158] sm:$0xff]
  %v64 = vld [vmem:[%s0 + $0x160] sm:$0xff]
  %v65 = vld [vmem:[%s0 + $0x168] sm:$0xff]
  %v66 = vld [vmem:[%s0 + $0x170] sm:$0xff]
  %v67 = vld [vmem:[%s0 + $0x178] sm:$0xff]
  %v68 = vld [vmem:[%s1] sm:$0xff]
  %v69 = vld [vmem:[%s1 + $0x8] sm:$0x1]
  %vm70 = vcmask 72704
  %v72 = vsel %vm70, %v20, 0
  %v75 = vsel %vm70, %v21, 0
  %v78 = vsel %vm70, %v22, 0
  %v81 = vsel %vm70, %v23, 0
  %v84 = vsel %vm70, %v24, 0
  %v87 = vsel %vm70, %v25, 0
  %v90 = vsel %vm70, %v26, 0
  %v93 = vsel %vm70, %v27, 0
  %v96 = vsel %vm70, %v28, 0
  %v99 = vsel %vm70, %v29, 0
  %v102 = vsel %vm70, %v30, 0
  %v105 = vsel %vm70, %v31, 0
  %v108 = vsel %vm70, %v32, 0
  %v111 = vsel %vm70, %v33, 0
  %v114 = vsel %vm70, %v34, 0
  %v117 = vsel %vm70, %v35, 0
  %v120 = vsel %vm70, %v36, 0
  %v123 = vsel %vm70, %v37, 0
  %v126 = vsel %vm70, %v38, 0
  %v129 = vsel %vm70, %v39, 0
  %v132 = vsel %vm70, %v40, 0
  %v135 = vsel %vm70, %v41, 0
  %v138 = vsel %vm70, %v42, 0
  %v141 = vsel %vm70, %v43, 0
  %v144 = vsel %vm70, %v44, 0
  %v147 = vsel %vm70, %v45, 0
  %v150 = vsel %vm70, %v46, 0
  %v153 = vsel %vm70, %v47, 0
  %v156 = vsel %vm70, %v48, 0
  %v159 = vsel %vm70, %v49, 0
  %v162 = vsel %vm70, %v50, 0
  %v165 = vsel %vm70, %v51, 0
  %v168 = vsel %vm70, %v52, 0
  %v171 = vsel %vm70, %v53, 0
  %v174 = vsel %vm70, %v54, 0
  %v177 = vsel %vm70, %v55, 0
  %v180 = vsel %vm70, %v56, 0
  %v183 = vsel %vm70, %v57, 0
  %v186 = vsel %vm70, %v58, 0
  %v189 = vsel %vm70, %v59, 0
  %v192 = vsel %vm70, %v60, 0
  %v195 = vsel %vm70, %v61, 0
  %v198 = vsel %vm70, %v62, 0
  %v201 = vsel %vm70, %v63, 0
  %v204 = vsel %vm70, %v64, 0
  %v207 = vsel %vm70, %v65, 0
  %v210 = vsel %vm70, %v66, 0
  %v213 = vsel %vm70, %v67, 0
  %vm215 = vcmask 1040384
  %v217 = vsel %vm215, %v69, 0
  %219 = vmatprep.subr.mxu0 0.0
  %220 = vmatpush1.msra.mxu0 %v68
  %221 = vmatprep.subr.mxu0 0.0
  %222 = vmatpush1.msra.mxu0 %v217
  %223 = vmatprep.subr.mxu0 0.0
  %224 = vmatpush1.msra.mxu0 0.0
  %225 = vmatprep.subr.mxu0 0.0
  %226 = vmatpush1.msra.mxu0 0.0
  %227 = vmatprep.subr.mxu0 0.0
  %228 = vmatpush1.msra.mxu0 0.0
  %229 = vmatprep.subr.mxu0 0.0
  %230 = vmatpush1.msra.mxu0 0.0
  %231 = vmatprep.subr.mxu0 0.0
  %232 = vmatpush1.msra.mxu0 0.0
  %233 = vmatprep.subr.mxu0 0.0
  %234 = vmatpush1.msra.mxu0 0.0
  %235 = vmatprep.subr.mxu0 0.0
  %236 = vmatpush1.msra.mxu0 0.0
  %237 = vmatprep.subr.mxu0 0.0
  %238 = vmatpush1.msra.mxu0 0.0
  %239 = vmatprep.subr.mxu0 0.0
  %240 = vmatpush1.msra.mxu0 0.0
  %241 = vmatprep.subr.mxu0 0.0
  %242 = vmatpush1.msra.mxu0 0.0
  %243 = vmatprep.subr.mxu0 0.0
  %244 = vmatpush1.msra.mxu0 0.0
  %245 = vmatprep.subr.mxu0 0.0
  %246 = vmatpush1.msra.mxu0 0.0
  %247 = vmatprep.subr.mxu0 0.0
  %248 = vmatpush1.msra.mxu0 0.0
  %249 = vmatprep.subr.mxu0 0.0
  %250 = vmatpush1.msra.mxu0 0.0
  %251 = vmatprep.subr.mxu0 0.0
  %252 = vmatpush1.msra.mxu0 0.0
  %253 = vmatprep.subr.mxu0 0.0
  %254 = vmatpush1.msra.mxu0 0.0
  %255 = vmatprep.subr.mxu0 0.0
  %256 = vmatpush1.msra.mxu0 0.0
  %257 = vmatprep.subr.mxu0 0.0
  %258 = vmatpush1.msra.mxu0 0.0
  %259 = vmatprep.subr.mxu0 0.0
  %260 = vmatpush1.msra.mxu0 0.0
  %261 = vmatprep.subr.mxu0 0.0
  %262 = vmatpush1.msra.mxu0 0.0
  %263 = vmatprep.subr.mxu0 0.0
  %264 = vmatpush1.msra.mxu0 0.0
  %265 = vmatprep.subr.mxu0 0.0
  %266 = vmatpush1.msra.mxu0 0.0
  %267 = vmatprep.subr.mxu0 0.0
  %268 = vmatpush1.msra.mxu0 0.0
  %269 = vmatprep.subr.mxu0 0.0
  %270 = vmatpush1.msra.mxu0 0.0
  %271 = vmatprep.subr.mxu0 0.0
  %272 = vmatpush1.msra.mxu0 0.0
  %273 = vmatprep.subr.mxu0 0.0
  %274 = vmatpush1.msra.mxu0 0.0
  %275 = vmatprep.subr.mxu0 0.0
  %276 = vmatpush1.msra.mxu0 0.0
  %277 = vmatprep.subr.mxu0 0.0
  %278 = vmatpush1.msra.mxu0 0.0
  %279 = vmatprep.subr.mxu0 0.0
  %280 = vmatpush1.msra.mxu0 0.0
  %281 = vmatprep.subr.mxu0 0.0
  %282 = vmatpush1.msra.mxu0 0.0
  %283 = vmatprep.mubr.f32.mxu0 0.0
  %284 = vmatmul.mubr.f32.gmra.mrb[0].mxu0 %v72
  %v285 = vpop.f32.mrb[0].mxu0
  %v286 = vadd.f32 0.0, %v285
  %v287 = vpop.f32.mrb[0].mxu0
  %288 = vmatprep.mubr.f32.mxu0 0.0
  %289 = vmatmul.mubr.f32.gmra.mrb[0].mxu0 %v75
  %v290 = vpop.f32.mrb[0].mxu0
  %v291 = vadd.f32 0.0, %v290
  %v292 = vpop.f32.mrb[0].mxu0
  %293 = vmatprep.mubr.f32.mxu0 0.0
  %294 = vmatmul.mubr.f32.gmra.mrb[0].mxu0 %v78
  %v295 = vpop.f32.mrb[0].mxu0
  %v296 = vadd.f32 0.0, %v295
  %v297 = vpop.f32.mrb[0].mxu0
  %298 = vmatprep.mubr.f32.mxu0 0.0
  %299 = vmatmul.mubr.f32.gmra.mrb[0].mxu0 %v81
  %v300 = vpop.f32.mrb[0].mxu0
  %v301 = vadd.f32 0.0, %v300
  %v302 = vpop.f32.mrb[0].mxu0
  %303 = vmatprep.mubr.f32.mxu0 0.0
  %304 = vmatmul.mubr.f32.gmra.mrb[0].mxu0 %v84
  %v305 = vpop.f32.mrb[0].mxu0
  %v306 = vadd.f32 0.0, %v305
  %v307 = vpop.f32.mrb[0].mxu0
  %308 = vmatprep.mubr.f32.mxu0 0.0
  %309 = vmatmul.mubr.f32.gmra.mrb[0].mxu0 %v87
  %v310 = vpop.f32.mrb[0].mxu0
  %v311 = vadd.f32 0.0, %v310
  %v312 = vpop.f32.mrb[0].mxu0
  %313 = vmatprep.mubr.f32.mxu0 0.0
  %314 = vmatmul.mubr.f32.gmra.mrb[0].mxu0 %v90
  %v315 = vpop.f32.mrb[0].mxu0
  %v316 = vadd.f32 0.0, %v315
  %v317 = vpop.f32.mrb[0].mxu0
  %318 = vmatprep.mubr.f32.mxu0 0.0
  %319 = vmatmul.mubr.f32.gmra.mrb[0].mxu0 %v93
  %v320 = vpop.f32.mrb[0].mxu0
  %v321 = vadd.f32 0.0, %v320
  %v322 = vpop.f32.mrb[0].mxu0
  %323 = vmatprep.mubr.f32.mxu0 0.0
  %324 = vmatmul.mubr.f32.gmra.mrb[0].mxu0 %v96
  %v325 = vpop.f32.mrb[0].mxu0
  %v326 = vadd.f32 0.0, %v325
  %v327 = vpop.f32.mrb[0].mxu0
  %328 = vmatprep.mubr.f32.mxu0 0.0
  %329 = vmatmul.mubr.f32.gmra.mrb[0].mxu0 %v99
  %v330 = vpop.f32.mrb[0].mxu0
  %v331 = vpop.f32.mrb[0].mxu0
  %332 = vmatprep.mubr.f32.mxu0 0.0
  %333 = vmatmul.mubr.f32.gmra.mrb[0].mxu0 %v102
  %v334 = vpop.f32.mrb[0].mxu0
  %v335 = vpop.f32.mrb[0].mxu0
  %336 = vmatprep.mubr.f32.mxu0 0.0
  %337 = vmatmul.mubr.f32.gmra.mrb[0].mxu0 %v105
  %v338 = vpop.f32.mrb[0].mxu0
  %v339 = vpop.f32.mrb[0].mxu0
  %340 = vmatprep.mubr.f32.mxu0 0.0
  %341 = vmatmul.mubr.f32.gmra.mrb[0].mxu0 %v108
  %v342 = vpop.f32.mrb[0].mxu0
  %v343 = vadd.f32 0.0, %v342
  %v344 = vpop.f32.mrb[0].mxu0
  %345 = vmatprep.mubr.f32.mxu0 0.0
  %346 = vmatmul.mubr.f32.gmra.mrb[0].mxu0 %v111
  %v347 = vpop.f32.mrb[0].mxu0
  %v348 = vadd.f32 0.0, %v347
  %v349 = vpop.f32.mrb[0].mxu0
  %350 = vmatprep.mubr.f32.mxu0 0.0
  %351 = vmatmul.mubr.f32.gmra.mrb[0].mxu0 %v114
  %v352 = vpop.f32.mrb[0].mxu0
  %v353 = vadd.f32 0.0, %v352
  %v354 = vpop.f32.mrb[0].mxu0
  %355 = vmatprep.mubr.f32.mxu0 0.0
  %356 = vmatmul.mubr.f32.gmra.mrb[0].mxu0 %v117
  %v357 = vpop.f32.mrb[0].mxu0
  %v358 = vadd.f32 0.0, %v357
  %v359 = vpop.f32.mrb[0].mxu0
  %360 = vmatprep.mubr.f32.mxu0 0.0
  %361 = vmatmul.mubr.f32.gmra.mrb[0].mxu0 %v120
  %v362 = vpop.f32.mrb[0].mxu0
  %v363 = vadd.f32 0.0, %v362
  %v364 = vpop.f32.mrb[0].mxu0
  %365 = vmatprep.mubr.f32.mxu0 0.0
  %366 = vmatmul.mubr.f32.gmra.mrb[0].mxu0 %v123
  %v367 = vpop.f32.mrb[0].mxu0
  %v368 = vadd.f32 0.0, %v367
  %v369 = vpop.f32.mrb[0].mxu0
  %370 = vmatprep.mubr.f32.mxu0 0.0
  %371 = vmatmul.mubr.f32.gmra.mrb[0].mxu0 %v126
  %v372 = vpop.f32.mrb[0].mxu0
  %v373 = vadd.f32 0.0, %v372
  %v374 = vpop.f32.mrb[0].mxu0
  %375 = vmatprep.mubr.f32.mxu0 0.0
  %376 = vmatmul.mubr.f32.gmra.mrb[0].mxu0 %v129
  %v377 = vpop.f32.mrb[0].mxu0
  %v378 = vadd.f32 0.0, %v377
  %v379 = vpop.f32.mrb[0].mxu0
  %380 = vmatprep.mubr.f32.mxu0 0.0
  %381 = vmatmul.mubr.f32.gmra.mrb[0].mxu0 %v132
  %v382 = vpop.f32.mrb[0].mxu0
  %v383 = vadd.f32 0.0, %v382
  %v384 = vpop.f32.mrb[0].mxu0
  %385 = vmatprep.mubr.f32.mxu0 0.0
  %386 = vmatmul.mubr.f32.gmra.mrb[0].mxu0 %v135
  %v387 = vpop.f32.mrb[0].mxu0
  %v388 = vpop.f32.mrb[0].mxu0
  %389 = vmatprep.mubr.f32.mxu0 0.0
  %390 = vmatmul.mubr.f32.gmra.mrb[0].mxu0 %v138
  %v391 = vpop.f32.mrb[0].mxu0
  %v392 = vpop.f32.mrb[0].mxu0
  %393 = vmatprep.mubr.f32.mxu0 0.0
  %394 = vmatmul.mubr.f32.gmra.mrb[0].mxu0 %v141
  %v395 = vpop.f32.mrb[0].mxu0
  %v396 = vpop.f32.mrb[0].mxu0
  %397 = vmatprep.mubr.f32.mxu0 0.0
  %398 = vmatmul.mubr.f32.gmra.mrb[0].mxu0 %v144
  %v399 = vpop.f32.mrb[0].mxu0
  %v400 = vadd.f32 0.0, %v399
  %v401 = vpop.f32.mrb[0].mxu0
  %402 = vmatprep.mubr.f32.mxu0 0.0
  %403 = vmatmul.mubr.f32.gmra.mrb[0].mxu0 %v147
  %v404 = vpop.f32.mrb[0].mxu0
  %v405 = vadd.f32 0.0, %v404
  %v406 = vpop.f32.mrb[0].mxu0
  %407 = vmatprep.mubr.f32.mxu0 0.0
  %408 = vmatmul.mubr.f32.gmra.mrb[0].mxu0 %v150
  %v409 = vpop.f32.mrb[0].mxu0
  %v410 = vadd.f32 0.0, %v409
  %v411 = vpop.f32.mrb[0].mxu0
  %412 = vmatprep.mubr.f32.mxu0 0.0
  %413 = vmatmul.mubr.f32.gmra.mrb[0].mxu0 %v153
  %v414 = vpop.f32.mrb[0].mxu0
  %v415 = vadd.f32 0.0, %v414
  %v416 = vpop.f32.mrb[0].mxu0
  %417 = vmatprep.mubr.f32.mxu0 0.0
  %418 = vmatmul.mubr.f32.gmra.mrb[0].mxu0 %v156
  %v419 = vpop.f32.mrb[0].mxu0
  %v420 = vadd.f32 0.0, %v419
  %v421 = vpop.f32.mrb[0].mxu0
  %422 = vmatprep.mubr.f32.mxu0 0.0
  %423 = vmatmul.mubr.f32.gmra.mrb[0].mxu0 %v159
  %v424 = vpop.f32.mrb[0].mxu0
  %v425 = vadd.f32 0.0, %v424
  %v426 = vpop.f32.mrb[0].mxu0
  %427 = vmatprep.mubr.f32.mxu0 0.0
  %428 = vmatmul.mubr.f32.gmra.mrb[0].mxu0 %v162
  %v429 = vpop.f32.mrb[0].mxu0
  %v430 = vadd.f32 0.0, %v429
  %v431 = vpop.f32.mrb[0].mxu0
  %432 = vmatprep.mubr.f32.mxu0 0.0
  %433 = vmatmul.mubr.f32.gmra.mrb[0].mxu0 %v165
  %v434 = vpop.f32.mrb[0].mxu0
  %v435 = vadd.f32 0.0, %v434
  %v436 = vpop.f32.mrb[0].mxu0
  %437 = vmatprep.mubr.f32.mxu0 0.0
  %438 = vmatmul.mubr.f32.gmra.mrb[0].mxu0 %v168
  %v439 = vpop.f32.mrb[0].mxu0
  %v440 = vadd.f32 0.0, %v439
  %v441 = vpop.f32.mrb[0].mxu0
  %442 = vmatprep.mubr.f32.mxu0 0.0
  %443 = vmatmul.mubr.f32.gmra.mrb[0].mxu0 %v171
  %v444 = vpop.f32.mrb[0].mxu0
  %v445 = vpop.f32.mrb[0].mxu0
  %446 = vmatprep.mubr.f32.mxu0 0.0
  %447 = vmatmul.mubr.f32.gmra.mrb[0].mxu0 %v174
  %v448 = vpop.f32.mrb[0].mxu0
  %v449 = vpop.f32.mrb[0].mxu0
  %450 = vmatprep.mubr.f32.mxu0 0.0
  %451 = vmatmul.mubr.f32.gmra.mrb[0].mxu0 %v177
  %v452 = vpop.f32.mrb[0].mxu0
  %v453 = vpop.f32.mrb[0].mxu0
  %454 = vmatprep.mubr.f32.mxu0 0.0
  %455 = vmatmul.mubr.f32.gmra.mrb[0].mxu0 %v180
  %v456 = vpop.f32.mrb[0].mxu0
  %v457 = vadd.f32 0.0, %v456
  %v458 = vpop.f32.mrb[0].mxu0
  %459 = vmatprep.mubr.f32.mxu0 0.0
  %460 = vmatmul.mubr.f32.gmra.mrb[0].mxu0 %v183
  %v461 = vpop.f32.mrb[0].mxu0
  %v462 = vadd.f32 0.0, %v461
  %v463 = vpop.f32.mrb[0].mxu0
  %464 = vmatprep.mubr.f32.mxu0 0.0
  %465 = vmatmul.mubr.f32.gmra.mrb[0].mxu0 %v186
  %v466 = vpop.f32.mrb[0].mxu0
  %v467 = vadd.f32 0.0, %v466
  %v468 = vpop.f32.mrb[0].mxu0
  %469 = vmatprep.mubr.f32.mxu0 0.0
  %470 = vmatmul.mubr.f32.gmra.mrb[0].mxu0 %v189
  %v471 = vpop.f32.mrb[0].mxu0
  %v472 = vadd.f32 0.0, %v471
  %v473 = vpop.f32.mrb[0].mxu0
  %474 = vmatprep.mubr.f32.mxu0 0.0
  %475 = vmatmul.mubr.f32.gmra.mrb[0].mxu0 %v192
  %v476 = vpop.f32.mrb[0].mxu0
  %v477 = vadd.f32 0.0, %v476
  %v478 = vpop.f32.mrb[0].mxu0
  %479 = vmatprep.mubr.f32.mxu0 0.0
  %480 = vmatmul.mubr.f32.gmra.mrb[0].mxu0 %v195
  %v481 = vpop.f32.mrb[0].mxu0
  %v482 = vadd.f32 0.0, %v481
  %v483 = vpop.f32.mrb[0].mxu0
  %484 = vmatprep.mubr.f32.mxu0 0.0
  %485 = vmatmul.mubr.f32.gmra.mrb[0].mxu0 %v198
  %v486 = vpop.f32.mrb[0].mxu0
  %v487 = vadd.f32 0.0, %v486
  %v488 = vpop.f32.mrb[0].mxu0
  %489 = vmatprep.mubr.f32.mxu0 0.0
  %490 = vmatmul.mubr.f32.gmra.mrb[0].mxu0 %v201
  %v491 = vpop.f32.mrb[0].mxu0
  %v492 = vadd.f32 0.0, %v491
  %v493 = vpop.f32.mrb[0].mxu0
  %494 = vmatprep.mubr.f32.mxu0 0.0
  %495 = vmatmul.mubr.f32.gmra.mrb[0].mxu0 %v204
  %v496 = vpop.f32.mrb[0].mxu0
  %v497 = vadd.f32 0.0, %v496
  %v498 = vpop.f32.mrb[0].mxu0
  %499 = vmatprep.mubr.f32.mxu0 0.0
  %500 = vmatmul.mubr.f32.gmra.mrb[0].mxu0 %v207
  %v501 = vpop.f32.mrb[0].mxu0
  %v502 = vpop.f32.mrb[0].mxu0
  %503 = vmatprep.mubr.f32.mxu0 0.0
  %504 = vmatmul.mubr.f32.gmra.mrb[0].mxu0 %v210
  %v505 = vpop.f32.mrb[0].mxu0
  %v506 = vpop.f32.mrb[0].mxu0
  %507 = vmatprep.mubr.f32.mxu0 0.0
  %508 = vmatmul.mubr.f32.gmra.mrb[0].mxu0 %v213
  %v509 = vpop.f32.mrb[0].mxu0
  %v510 = vpop.f32.mrb[0].mxu0
  %511 = vdwg.mxu0
  %v512 = vmax.f32 %v286, %v343
  %v513 = vmax.f32 %v291, %v348
  %v514 = vmax.f32 %v296, %v353
  %v515 = vmax.f32 %v301, %v358
  %v516 = vmax.f32 %v306, %v363
  %v517 = vmax.f32 %v311, %v368
  %v518 = vmax.f32 %v316, %v373
  %v519 = vmax.f32 %v321, %v378
  %v520 = vmax.f32 %v326, %v383
  %v521 = vmax.f32 %v512, 0.0
  %v522 = vmax.f32 %v513, 0.0
  %v523 = vmax.f32 %v514, 0.0
  %v524 = vmax.f32 %v515, 0.0
  %v525 = vmax.f32 %v516, 0.0
  %v526 = vmax.f32 %v517, 0.0
  %v527 = vmax.f32 %v518, 0.0
  %v528 = vmax.f32 %v519, 0.0
  %v529 = vmax.f32 %v520, 0.0
  %v530 = vmax.f32 %v400, %v457
  %v531 = vmax.f32 %v405, %v462
  %v532 = vmax.f32 %v410, %v467
  %v533 = vmax.f32 %v415, %v472
  %v534 = vmax.f32 %v420, %v477
  %v535 = vmax.f32 %v425, %v482
  %v536 = vmax.f32 %v430, %v487
  %v537 = vmax.f32 %v435, %v492
  %v538 = vmax.f32 %v440, %v497
  %v539 = vmax.f32 %v530, 0.0
  %v540 = vmax.f32 %v531, 0.0
  %v541 = vmax.f32 %v532, 0.0
  %v542 = vmax.f32 %v533, 0.0
  %v543 = vmax.f32 %v534, 0.0
  %v544 = vmax.f32 %v535, 0.0
  %v545 = vmax.f32 %v536, 0.0
  %v546 = vmax.f32 %v537, 0.0
  %v547 = vmax.f32 %v538, 0.0
  %v548 = vld [vmem:[%s2] sm:$0xff]
  %v549 = vld [vmem:[%s2 + $0x8] sm:$0xff]
  %v550 = vld [vmem:[%s2 + $0x10] sm:$0xff]
  %vm551 = vcmask 64512
  %v553 = vsel %vm551, %v539, 0
  %v556 = vsel %vm551, %v540, 0
  %v559 = vsel %vm551, %v541, 0
  %v562 = vsel %vm551, %v542, 0
  %v565 = vsel %vm551, %v543, 0
  %v568 = vsel %vm551, %v544, 0
  %v571 = vsel %vm551, %v545, 0
  %v574 = vsel %vm551, %v546, 0
  %576 = vmatprep.subr.mxu0 0.0
  %577 = vmatpush1.msra.mxu0 %v549
  %578 = vmatprep.subr.mxu0 0.0
  %579 = vmatpush1.msra.mxu0 0.0
  %580 = vmatprep.subr.mxu0 0.0
  %581 = vmatpush1.msra.mxu0 0.0
  %582 = vmatprep.subr.mxu0 0.0
  %583 = vmatpush1.msra.mxu0 0.0
  %584 = vmatprep.subr.mxu0 0.0
  %585 = vmatpush1.msra.mxu0 0.0
  %586 = vmatprep.subr.mxu0 0.0
  %587 = vmatpush1.msra.mxu0 0.0
  %588 = vmatprep.subr.mxu0 0.0
  %589 = vmatpush1.msra.mxu0 0.0
  %590 = vmatprep.subr.mxu0 0.0
  %591 = vmatpush1.msra.mxu0 0.0
  %592 = vmatprep.subr.mxu0 0.0
  %593 = vmatpush1.msra.mxu0 0.0
  %594 = vmatprep.subr.mxu0 0.0
  %595 = vmatpush1.msra.mxu0 0.0
  %596 = vmatprep.subr.mxu0 0.0
  %597 = vmatpush1.msra.mxu0 0.0
  %598 = vmatprep.subr.mxu0 0.0
  %599 = vmatpush1.msra.mxu0 0.0
  %600 = vmatprep.subr.mxu0 0.0
  %601 = vmatpush1.msra.mxu0 0.0
  %602 = vmatprep.subr.mxu0 0.0
  %603 = vmatpush1.msra.mxu0 0.0
  %604 = vmatprep.subr.mxu0 0.0
  %605 = vmatpush1.msra.mxu0 0.0
  %606 = vmatprep.subr.mxu0 0.0
  %607 = vmatpush1.msra.mxu0 0.0
  %608 = vmatprep.subr.mxu0 0.0
  %609 = vmatpush1.msra.mxu0 0.0
  %610 = vmatprep.subr.mxu0 0.0
  %611 = vmatpush1.msra.mxu0 0.0
  %612 = vmatprep.subr.mxu0 0.0
  %613 = vmatpush1.msra.mxu0 0.0
  %614 = vmatprep.subr.mxu0 0.0
  %615 = vmatpush1.msra.mxu0 0.0
  %616 = vmatprep.subr.mxu0 0.0
  %617 = vmatpush1.msra.mxu0 0.0
  %618 = vmatprep.subr.mxu0 0.0
  %619 = vmatpush1.msra.mxu0 0.0
  %620 = vmatprep.subr.mxu0 0.0
  %621 = vmatpush1.msra.mxu0 0.0
  %622 = vmatprep.subr.mxu0 0.0
  %623 = vmatpush1.msra.mxu0 0.0
  %624 = vmatprep.subr.mxu0 0.0
  %625 = vmatpush1.msra.mxu0 0.0
  %626 = vmatprep.subr.mxu0 0.0
  %627 = vmatpush1.msra.mxu0 0.0
  %628 = vmatprep.subr.mxu0 0.0
  %629 = vmatpush1.msra.mxu0 0.0
  %630 = vmatprep.subr.mxu0 0.0
  %631 = vmatpush1.msra.mxu0 0.0
  %632 = vmatprep.subr.mxu0 0.0
  %633 = vmatpush1.msra.mxu0 0.0
  %634 = vmatprep.subr.mxu0 0.0
  %635 = vmatpush1.msra.mxu0 0.0
  %636 = vmatprep.subr.mxu0 0.0
  %637 = vmatpush1.msra.mxu0 0.0
  %638 = vmatprep.subr.mxu0 0.0
  %639 = vmatpush1.msra.mxu0 0.0
  %640 = vmatprep.mubr.f32.mxu0 0.0
  %641 = vmatmul.mubr.f32.gmra.mrb[0].mxu0 %v553
  %v642 = vpop.f32.mrb[0].mxu0
  %v643 = vadd.f32 0.0, %v642
  %v644 = vpop.f32.mrb[0].mxu0
  %645 = vmatprep.mubr.f32.mxu0 0.0
  %646 = vmatmul.mubr.f32.gmra.mrb[0].mxu0 %v556
  %v647 = vpop.f32.mrb[0].mxu0
  %v648 = vadd.f32 0.0, %v647
  %v649 = vpop.f32.mrb[0].mxu0
  %650 = vmatprep.mubr.f32.mxu0 0.0
  %651 = vmatmul.mubr.f32.gmra.mrb[0].mxu0 %v559
  %v652 = vpop.f32.mrb[0].mxu0
  %v653 = vadd.f32 0.0, %v652
  %v654 = vpop.f32.mrb[0].mxu0
  %655 = vmatprep.mubr.f32.mxu0 0.0
  %656 = vmatmul.mubr.f32.gmra.mrb[0].mxu0 %v562
  %v657 = vpop.f32.mrb[0].mxu0
  %v658 = vadd.f32 0.0, %v657
  %v659 = vpop.f32.mrb[0].mxu0
  %660 = vmatprep.mubr.f32.mxu0 0.0
  %661 = vmatmul.mubr.f32.gmra.mrb[0].mxu0 %v565
  %v662 = vpop.f32.mrb[0].mxu0
  %v663 = vadd.f32 0.0, %v662
  %v664 = vpop.f32.mrb[0].mxu0
  %665 = vmatprep.mubr.f32.mxu0 0.0
  %666 = vmatmul.mubr.f32.gmra.mrb[0].mxu0 %v568
  %v667 = vpop.f32.mrb[0].mxu0
  %v668 = vadd.f32 0.0, %v667
  %v669 = vpop.f32.mrb[0].mxu0
  %670 = vmatprep.mubr.f32.mxu0 0.0
  %671 = vmatmul.mubr.f32.gmra.mrb[0].mxu0 %v571
  %v672 = vpop.f32.mrb[0].mxu0
  %v673 = vpop.f32.mrb[0].mxu0
  %674 = vmatprep.mubr.f32.mxu0 0.0
  %675 = vmatmul.mubr.f32.gmra.mrb[0].mxu0 %v574
  %v676 = vpop.f32.mrb[0].mxu0
  %v677 = vpop.f32.mrb[0].mxu0
  %678 = vdwg.mxu0
  %v680 = vsel %vm551, %v521, 0
  %v683 = vsel %vm551, %v522, 0
  %v686 = vsel %vm551, %v523, 0
  %v689 = vsel %vm551, %v524, 0
  %v692 = vsel %vm551, %v525, 0
  %v695 = vsel %vm551, %v526, 0
  %v698 = vsel %vm551, %v527, 0
  %v701 = vsel %vm551, %v528, 0
  %703 = vmatprep.subr.mxu0 0.0
  %704 = vmatpush1.msra.mxu0 %v548
  %705 = vmatprep.subr.mxu0 0.0
  %706 = vmatpush1.msra.mxu0 0.0
  %707 = vmatprep.subr.mxu0 0.0
  %708 = vmatpush1.msra.mxu0 0.0
  %709 = vmatprep.subr.mxu0 0.0
  %710 = vmatpush1.msra.mxu0 0.0
  %711 = vmatprep.subr.mxu0 0.0
  %712 = vmatpush1.msra.mxu0 0.0
  %713 = vmatprep.subr.mxu0 0.0
  %714 = vmatpush1.msra.mxu0 0.0
  %715 = vmatprep.subr.mxu0 0.0
  %716 = vmatpush1.msra.mxu0 0.0
  %717 = vmatprep.subr.mxu0 0.0
  %718 = vmatpush1.msra.mxu0 0.0
  %719 = vmatprep.subr.mxu0 0.0
  %720 = vmatpush1.msra.mxu0 0.0
  %721 = vmatprep.subr.mxu0 0.0
  %722 = vmatpush1.msra.mxu0 0.0
  %723 = vmatprep.subr.mxu0 0.0
  %724 = vmatpush1.msra.mxu0 0.0
  %725 = vmatprep.subr.mxu0 0.0
  %726 = vmatpush1.msra.mxu0 0.0
  %727 = vmatprep.subr.mxu0 0.0
  %728 = vmatpush1.msra.mxu0 0.0
  %729 = vmatprep.subr.mxu0 0.0
  %730 = vmatpush1.msra.mxu0 0.0
  %731 = vmatprep.subr.mxu0 0.0
  %732 = vmatpush1.msra.mxu0 0.0
  %733 = vmatprep.subr.mxu0 0.0
  %734 = vmatpush1.msra.mxu0 0.0
  %735 = vmatprep.subr.mxu0 0.0
  %736 = vmatpush1.msra.mxu0 0.0
  %737 = vmatprep.subr.mxu0 0.0
  %738 = vmatpush1.msra.mxu0 0.0
  %739 = vmatprep.subr.mxu0 0.0
  %740 = vmatpush1.msra.mxu0 0.0
  %741 = vmatprep.subr.mxu0 0.0
  %742 = vmatpush1.msra.mxu0 0.0
  %743 = vmatprep.subr.mxu0 0.0
  %744 = vmatpush1.msra.mxu0 0.0
  %745 = vmatprep.subr.mxu0 0.0
  %746 = vmatpush1.msra.mxu0 0.0
  %747 = vmatprep.subr.mxu0 0.0
  %748 = vmatpush1.msra.mxu0 0.0
  %749 = vmatprep.subr.mxu0 0.0
  %750 = vmatpush1.msra.mxu0 0.0
  %751 = vmatprep.subr.mxu0 0.0
  %752 = vmatpush1.msra.mxu0 0.0
  %753 = vmatprep.subr.mxu0 0.0
  %754 = vmatpush1.msra.mxu0 0.0
  %755 = vmatprep.subr.mxu0 0.0
  %756 = vmatpush1.msra.mxu0 0.0
  %757 = vmatprep.subr.mxu0 0.0
  %758 = vmatpush1.msra.mxu0 0.0
  %759 = vmatprep.subr.mxu0 0.0
  %760 = vmatpush1.msra.mxu0 0.0
  %761 = vmatprep.subr.mxu0 0.0
  %762 = vmatpush1.msra.mxu0 0.0
  %763 = vmatprep.subr.mxu0 0.0
  %764 = vmatpush1.msra.mxu0 0.0
  %765 = vmatprep.subr.mxu0 0.0
  %766 = vmatpush1.msra.mxu0 0.0
  %767 = vmatprep.mubr.f32.mxu0 0.0
  %768 = vmatmul.mubr.f32.gmra.mrb[0].mxu0 %v680
  %v769 = vpop.f32.mrb[0].mxu0
  %v770 = vadd.f32 %v643, %v769
  %v771 = vpop.f32.mrb[0].mxu0
  %772 = vmatprep.mubr.f32.mxu0 0.0
  %773 = vmatmul.mubr.f32.gmra.mrb[0].mxu0 %v683
  %v774 = vpop.f32.mrb[0].mxu0
  %v775 = vadd.f32 %v648, %v774
  %v776 = vpop.f32.mrb[0].mxu0
  %777 = vmatprep.mubr.f32.mxu0 0.0
  %778 = vmatmul.mubr.f32.gmra.mrb[0].mxu0 %v686
  %v779 = vpop.f32.mrb[0].mxu0
  %v780 = vadd.f32 %v653, %v779
  %v781 = vpop.f32.mrb[0].mxu0
  %782 = vmatprep.mubr.f32.mxu0 0.0
  %783 = vmatmul.mubr.f32.gmra.mrb[0].mxu0 %v689
  %v784 = vpop.f32.mrb[0].mxu0
  %v785 = vadd.f32 %v658, %v784
  %v786 = vpop.f32.mrb[0].mxu0
  %787 = vmatprep.mubr.f32.mxu0 0.0
  %788 = vmatmul.mubr.f32.gmra.mrb[0].mxu0 %v692
  %v789 = vpop.f32.mrb[0].mxu0
  %v790 = vadd.f32 %v663, %v789
  %v791 = vpop.f32.mrb[0].mxu0
  %792 = vmatprep.mubr.f32.mxu0 0.0
  %793 = vmatmul.mubr.f32.gmra.mrb[0].mxu0 %v695
  %v794 = vpop.f32.mrb[0].mxu0
  %v795 = vadd.f32 %v668, %v794
  %v796 = vpop.f32.mrb[0].mxu0
  %797 = vmatprep.mubr.f32.mxu0 0.0
  %798 = vmatmul.mubr.f32.gmra.mrb[0].mxu0 %v698
  %v799 = vpop.f32.mrb[0].mxu0
  %v800 = vpop.f32.mrb[0].mxu0
  %801 = vmatprep.mubr.f32.mxu0 0.0
  %802 = vmatmul.mubr.f32.gmra.mrb[0].mxu0 %v701
  %v803 = vpop.f32.mrb[0].mxu0
  %v804 = vpop.f32.mrb[0].mxu0
  %805 = vdwg.mxu0
  %v807 = vsel %vm551, %v529, 0
  %809 = vmatprep.subr.mxu0 0.0
  %810 = vmatpush1.msra.mxu0 %v550
  %811 = vmatprep.subr.mxu0 0.0
  %812 = vmatpush1.msra.mxu0 0.0
  %813 = vmatprep.subr.mxu0 0.0
  %814 = vmatpush1.msra.mxu0 0.0
  %815 = vmatprep.subr.mxu0 0.0
  %816 = vmatpush1.msra.mxu0 0.0
  %817 = vmatprep.subr.mxu0 0.0
  %818 = vmatpush1.msra.mxu0 0.0
  %819 = vmatprep.subr.mxu0 0.0
  %820 = vmatpush1.msra.mxu0 0.0
  %821 = vmatprep.subr.mxu0 0.0
  %822 = vmatpush1.msra.mxu0 0.0
  %823 = vmatprep.subr.mxu0 0.0
  %824 = vmatpush1.msra.mxu0 0.0
  %825 = vmatprep.subr.mxu0 0.0
  %826 = vmatpush1.msra.mxu0 0.0
  %827 = vmatprep.subr.mxu0 0.0
  %828 = vmatpush1.msra.mxu0 0.0
  %829 = vmatprep.subr.mxu0 0.0
  %830 = vmatpush1.msra.mxu0 0.0
  %831 = vmatprep.subr.mxu0 0.0
  %832 = vmatpush1.msra.mxu0 0.0
  %833 = vmatprep.subr.mxu0 0.0
  %834 = vmatpush1.msra.mxu0 0.0
  %835 = vmatprep.subr.mxu0 0.0
  %836 = vmatpush1.msra.mxu0 0.0
  %837 = vmatprep.subr.mxu0 0.0
  %838 = vmatpush1.msra.mxu0 0.0
  %839 = vmatprep.subr.mxu0 0.0
  %840 = vmatpush1.msra.mxu0 0.0
  %841 = vmatprep.subr.mxu0 0.0
  %842 = vmatpush1.msra.mxu0 0.0
  %843 = vmatprep.subr.mxu0 0.0
  %844 = vmatpush1.msra.mxu0 0.0
  %845 = vmatprep.subr.mxu0 0.0
  %846 = vmatpush1.msra.mxu0 0.0
  %847 = vmatprep.subr.mxu0 0.0
  %848 = vmatpush1.msra.mxu0 0.0
  %849 = vmatprep.subr.mxu0 0.0
  %850 = vmatpush1.msra.mxu0 0.0
  %851 = vmatprep.subr.mxu0 0.0
  %852 = vmatpush1.msra.mxu0 0.0
  %853 = vmatprep.subr.mxu0 0.0
  %854 = vmatpush1.msra.mxu0 0.0
  %855 = vmatprep.subr.mxu0 0.0
  %856 = vmatpush1.msra.mxu0 0.0
  %857 = vmatprep.subr.mxu0 0.0
  %858 = vmatpush1.msra.mxu0 0.0
  %859 = vmatprep.subr.mxu0 0.0
  %860 = vmatpush1.msra.mxu0 0.0
  %861 = vmatprep.subr.mxu0 0.0
  %862 = vmatpush1.msra.mxu0 0.0
  %863 = vmatprep.subr.mxu0 0.0
  %864 = vmatpush1.msra.mxu0 0.0
  %865 = vmatprep.subr.mxu0 0.0
  %866 = vmatpush1.msra.mxu0 0.0
  %867 = vmatprep.subr.mxu0 0.0
  %868 = vmatpush1.msra.mxu0 0.0
  %869 = vmatprep.subr.mxu0 0.0
  %870 = vmatpush1.msra.mxu0 0.0
  %871 = vmatprep.subr.mxu0 0.0
  %872 = vmatpush1.msra.mxu0 0.0
  %873 = vmatprep.mubr.f32.mxu0 0.0
  %874 = vmatmul.mubr.f32.gmra.mrb[0].mxu0 %v683
  %v875 = vpop.f32.mrb[0].mxu0
  %v876 = vadd.f32 0.0, %v875
  %v877 = vpop.f32.mrb[0].mxu0
  %878 = vmatprep.mubr.f32.mxu0 0.0
  %879 = vmatmul.mubr.f32.gmra.mrb[0].mxu0 %v686
  %v880 = vpop.f32.mrb[0].mxu0
  %v881 = vadd.f32 0.0, %v880
  %v882 = vpop.f32.mrb[0].mxu0
  %883 = vmatprep.mubr.f32.mxu0 0.0
  %884 = vmatmul.mubr.f32.gmra.mrb[0].mxu0 %v689
  %v885 = vpop.f32.mrb[0].mxu0
  %v886 = vadd.f32 0.0, %v885
  %v887 = vpop.f32.mrb[0].mxu0
  %888 = vmatprep.mubr.f32.mxu0 0.0
  %889 = vmatmul.mubr.f32.gmra.mrb[0].mxu0 %v692
  %v890 = vpop.f32.mrb[0].mxu0
  %v891 = vadd.f32 0.0, %v890
  %v892 = vpop.f32.mrb[0].mxu0
  %893 = vmatprep.mubr.f32.mxu0 0.0
  %894 = vmatmul.mubr.f32.gmra.mrb[0].mxu0 %v695
  %v895 = vpop.f32.mrb[0].mxu0
  %v896 = vadd.f32 0.0, %v895
  %v897 = vpop.f32.mrb[0].mxu0
  %898 = vmatprep.mubr.f32.mxu0 0.0
  %899 = vmatmul.mubr.f32.gmra.mrb[0].mxu0 %v698
  %v900 = vpop.f32.mrb[0].mxu0
  %v901 = vadd.f32 0.0, %v900
  %v902 = vpop.f32.mrb[0].mxu0
  %903 = vmatprep.mubr.f32.mxu0 0.0
  %904 = vmatmul.mubr.f32.gmra.mrb[0].mxu0 %v701
  %v905 = vpop.f32.mrb[0].mxu0
  %v906 = vpop.f32.mrb[0].mxu0
  %907 = vmatprep.mubr.f32.mxu0 0.0
  %908 = vmatmul.mubr.f32.gmra.mrb[0].mxu0 %v807
  %v909 = vpop.f32.mrb[0].mxu0
  %v910 = vpop.f32.mrb[0].mxu0
  %911 = vdwg.mxu0
  %v912 = vadd.f32 %v770, %v876
  %v913 = vadd.f32 %v775, %v881
  %v914 = vadd.f32 %v780, %v886
  %v915 = vadd.f32 %v785, %v891
  %v916 = vadd.f32 %v790, %v896
  %v917 = vadd.f32 %v795, %v901
  %918 = vmatprep.subr.mxu0 0.0
  %919 = vmatpush1.msra.mxu0 %v549
  %920 = vmatprep.subr.mxu0 0.0
  %921 = vmatpush1.msra.mxu0 0.0
  %922 = vmatprep.subr.mxu0 0.0
  %923 = vmatpush1.msra.mxu0 0.0
  %924 = vmatprep.subr.mxu0 0.0
  %925 = vmatpush1.msra.mxu0 0.0
  %926 = vmatprep.subr.mxu0 0.0
  %927 = vmatpush1.msra.mxu0 0.0
  %928 = vmatprep.subr.mxu0 0.0
  %929 = vmatpush1.msra.mxu0 0.0
  %930 = vmatprep.subr.mxu0 0.0
  %931 = vmatpush1.msra.mxu0 0.0
  %932 = vmatprep.subr.mxu0 0.0
  %933 = vmatpush1.msra.mxu0 0.0
  %934 = vmatprep.subr.mxu0 0.0
  %935 = vmatpush1.msra.mxu0 0.0
  %936 = vmatprep.subr.mxu0 0.0
  %937 = vmatpush1.msra.mxu0 0.0
  %938 = vmatprep.subr.mxu0 0.0
  %939 = vmatpush1.msra.mxu0 0.0
  %940 = vmatprep.subr.mxu0 0.0
  %941 = vmatpush1.msra.mxu0 0.0
  %942 = vmatprep.subr.mxu0 0.0
  %943 = vmatpush1.msra.mxu0 0.0
  %944 = vmatprep.subr.mxu0 0.0
  %945 = vmatpush1.msra.mxu0 0.0
  %946 = vmatprep.subr.mxu0 0.0
  %947 = vmatpush1.msra.mxu0 0.0
  %948 = vmatprep.subr.mxu0 0.0
  %949 = vmatpush1.msra.mxu0 0.0
  %950 = vmatprep.subr.mxu0 0.0
  %951 = vmatpush1.msra.mxu0 0.0
  %952 = vmatprep.subr.mxu0 0.0
  %953 = vmatpush1.msra.mxu0 0.0
  %954 = vmatprep.subr.mxu0 0.0
  %955 = vmatpush1.msra.mxu0 0.0
  %956 = vmatprep.subr.mxu0 0.0
  %957 = vmatpush1.msra.mxu0 0.0
  %958 = vmatprep.subr.mxu0 0.0
  %959 = vmatpush1.msra.mxu0 0.0
  %960 = vmatprep.subr.mxu0 0.0
  %961 = vmatpush1.msra.mxu0 0.0
  %962 = vmatprep.subr.mxu0 0.0
  %963 = vmatpush1.msra.mxu0 0.0
  %964 = vmatprep.subr.mxu0 0.0
  %965 = vmatpush1.msra.mxu0 0.0
  %966 = vmatprep.subr.mxu0 0.0
  %967 = vmatpush1.msra.mxu0 0.0
  %968 = vmatprep.subr.mxu0 0.0
  %969 = vmatpush1.msra.mxu0 0.0
  %970 = vmatprep.subr.mxu0 0.0
  %971 = vmatpush1.msra.mxu0 0.0
  %972 = vmatprep.subr.mxu0 0.0
  %973 = vmatpush1.msra.mxu0 0.0
  %974 = vmatprep.subr.mxu0 0.0
  %975 = vmatpush1.msra.mxu0 0.0
  %976 = vmatprep.subr.mxu0 0.0
  %977 = vmatpush1.msra.mxu0 0.0
  %978 = vmatprep.subr.mxu0 0.0
  %979 = vmatpush1.msra.mxu0 0.0
  %980 = vmatprep.subr.mxu0 0.0
  %981 = vmatpush1.msra.mxu0 0.0
  %982 = vmatprep.mubr.f32.mxu0 0.0
  %983 = vmatmul.mubr.f32.gmra.mrb[0].mxu0 %v683
  %v984 = vpop.f32.mrb[0].mxu0
  %v985 = vadd.f32 0.0, %v984
  %v986 = vpop.f32.mrb[0].mxu0
  %987 = vmatprep.mubr.f32.mxu0 0.0
  %988 = vmatmul.mubr.f32.gmra.mrb[0].mxu0 %v686
  %v989 = vpop.f32.mrb[0].mxu0
  %v990 = vadd.f32 0.0, %v989
  %v991 = vpop.f32.mrb[0].mxu0
  %992 = vmatprep.mubr.f32.mxu0 0.0
  %993 = vmatmul.mubr.f32.gmra.mrb[0].mxu0 %v689
  %v994 = vpop.f32.mrb[0].mxu0
  %v995 = vadd.f32 0.0, %v994
  %v996 = vpop.f32.mrb[0].mxu0
  %997 = vmatprep.mubr.f32.mxu0 0.0
  %998 = vmatmul.mubr.f32.gmra.mrb[0].mxu0 %v692
  %v999 = vpop.f32.mrb[0].mxu0
  %v1000 = vadd.f32 0.0, %v999
  %v1001 = vpop.f32.mrb[0].mxu0
  %1002 = vmatprep.mubr.f32.mxu0 0.0
  %1003 = vmatmul.mubr.f32.gmra.mrb[0].mxu0 %v695
  %v1004 = vpop.f32.mrb[0].mxu0
  %v1005 = vadd.f32 0.0, %v1004
  %v1006 = vpop.f32.mrb[0].mxu0
  %1007 = vmatprep.mubr.f32.mxu0 0.0
  %1008 = vmatmul.mubr.f32.gmra.mrb[0].mxu0 %v698
  %v1009 = vpop.f32.mrb[0].mxu0
  %v1010 = vadd.f32 0.0, %v1009
  %v1011 = vpop.f32.mrb[0].mxu0
  %1012 = vmatprep.mubr.f32.mxu0 0.0
  %1013 = vmatmul.mubr.f32.gmra.mrb[0].mxu0 %v701
  %v1014 = vpop.f32.mrb[0].mxu0
  %v1015 = vpop.f32.mrb[0].mxu0
  %1016 = vmatprep.mubr.f32.mxu0 0.0
  %1017 = vmatmul.mubr.f32.gmra.mrb[0].mxu0 %v807
  %v1018 = vpop.f32.mrb[0].mxu0
  %v1019 = vpop.f32.mrb[0].mxu0
  %1020 = vdwg.mxu0
  %1021 = vmatprep.subr.mxu0 0.0
  %1022 = vmatpush1.msra.mxu0 %v548
  %1023 = vmatprep.subr.mxu0 0.0
  %1024 = vmatpush1.msra.mxu0 0.0
  %1025 = vmatprep.subr.mxu0 0.0
  %1026 = vmatpush1.msra.mxu0 0.0
  %1027 = vmatprep.subr.mxu0 0.0
  %1028 = vmatpush1.msra.mxu0 0.0
  %1029 = vmatprep.subr.mxu0 0.0
  %1030 = vmatpush1.msra.mxu0 0.0
  %1031 = vmatprep.subr.mxu0 0.0
  %1032 = vmatpush1.msra.mxu0 0.0
  %1033 = vmatprep.subr.mxu0 0.0
  %1034 = vmatpush1.msra.mxu0 0.0
  %1035 = vmatprep.subr.mxu0 0.0
  %1036 = vmatpush1.msra.mxu0 0.0
  %1037 = vmatprep.subr.mxu0 0.0
  %1038 = vmatpush1.msra.mxu0 0.0
  %1039 = vmatprep.subr.mxu0 0.0
  %1040 = vmatpush1.msra.mxu0 0.0
  %1041 = vmatprep.subr.mxu0 0.0
  %1042 = vmatpush1.msra.mxu0 0.0
  %1043 = vmatprep.subr.mxu0 0.0
  %1044 = vmatpush1.msra.mxu0 0.0
  %1045 = vmatprep.subr.mxu0 0.0
  %1046 = vmatpush1.msra.mxu0 0.0
  %1047 = vmatprep.subr.mxu0 0.0
  %1048 = vmatpush1.msra.mxu0 0.0
  %1049 = vmatprep.subr.mxu0 0.0
  %1050 = vmatpush1.msra.mxu0 0.0
  %1051 = vmatprep.subr.mxu0 0.0
  %1052 = vmatpush1.msra.mxu0 0.0
  %1053 = vmatprep.subr.mxu0 0.0
  %1054 = vmatpush1.msra.mxu0 0.0
  %1055 = vmatprep.subr.mxu0 0.0
  %1056 = vmatpush1.msra.mxu0 0.0
  %1057 = vmatprep.subr.mxu0 0.0
  %1058 = vmatpush1.msra.mxu0 0.0
  %1059 = vmatprep.subr.mxu0 0.0
  %1060 = vmatpush1.msra.mxu0 0.0
  %1061 = vmatprep.subr.mxu0 0.0
  %1062 = vmatpush1.msra.mxu0 0.0
  %1063 = vmatprep.subr.mxu0 0.0
  %1064 = vmatpush1.msra.mxu0 0.0
  %1065 = vmatprep.subr.mxu0 0.0
  %1066 = vmatpush1.msra.mxu0 0.0
  %1067 = vmatprep.subr.mxu0 0.0
  %1068 = vmatpush1.msra.mxu0 0.0
  %1069 = vmatprep.subr.mxu0 0.0
  %1070 = vmatpush1.msra.mxu0 0.0
  %1071 = vmatprep.subr.mxu0 0.0
  %1072 = vmatpush1.msra.mxu0 0.0
  %1073 = vmatprep.subr.mxu0 0.0
  %1074 = vmatpush1.msra.mxu0 0.0
  %1075 = vmatprep.subr.mxu0 0.0
  %1076 = vmatpush1.msra.mxu0 0.0
  %1077 = vmatprep.subr.mxu0 0.0
  %1078 = vmatpush1.msra.mxu0 0.0
  %1079 = vmatprep.subr.mxu0 0.0
  %1080 = vmatpush1.msra.mxu0 0.0
  %1081 = vmatprep.subr.mxu0 0.0
  %1082 = vmatpush1.msra.mxu0 0.0
  %1083 = vmatprep.subr.mxu0 0.0
  %1084 = vmatpush1.msra.mxu0 0.0
  %1085 = vmatprep.mubr.f32.mxu0 0.0
  %1086 = vmatmul.mubr.f32.gmra.mrb[0].mxu0 %v553
  %v1087 = vpop.f32.mrb[0].mxu0
  %v1088 = vadd.f32 %v985, %v1087
  %v1089 = vpop.f32.mrb[0].mxu0
  %1090 = vmatprep.mubr.f32.mxu0 0.0
  %1091 = vmatmul.mubr.f32.gmra.mrb[0].mxu0 %v556
  %v1092 = vpop.f32.mrb[0].mxu0
  %v1093 = vadd.f32 %v990, %v1092
  %v1094 = vpop.f32.mrb[0].mxu0
  %1095 = vmatprep.mubr.f32.mxu0 0.0
  %1096 = vmatmul.mubr.f32.gmra.mrb[0].mxu0 %v559
  %v1097 = vpop.f32.mrb[0].mxu0
  %v1098 = vadd.f32 %v995, %v1097
  %v1099 = vpop.f32.mrb[0].mxu0
  %1100 = vmatprep.mubr.f32.mxu0 0.0
  %1101 = vmatmul.mubr.f32.gmra.mrb[0].mxu0 %v562
  %v1102 = vpop.f32.mrb[0].mxu0
  %v1103 = vadd.f32 %v1000, %v1102
  %v1104 = vpop.f32.mrb[0].mxu0
  %1105 = vmatprep.mubr.f32.mxu0 0.0
  %1106 = vmatmul.mubr.f32.gmra.mrb[0].mxu0 %v565
  %v1107 = vpop.f32.mrb[0].mxu0
  %v1108 = vadd.f32 %v1005, %v1107
  %v1109 = vpop.f32.mrb[0].mxu0
  %1110 = vmatprep.mubr.f32.mxu0 0.0
  %1111 = vmatmul.mubr.f32.gmra.mrb[0].mxu0 %v568
  %v1112 = vpop.f32.mrb[0].mxu0
  %v1113 = vadd.f32 %v1010, %v1112
  %v1114 = vpop.f32.mrb[0].mxu0
  %1115 = vmatprep.mubr.f32.mxu0 0.0
  %1116 = vmatmul.mubr.f32.gmra.mrb[0].mxu0 %v571
  %v1117 = vpop.f32.mrb[0].mxu0
  %v1118 = vpop.f32.mrb[0].mxu0
  %1119 = vmatprep.mubr.f32.mxu0 0.0
  %1120 = vmatmul.mubr.f32.gmra.mrb[0].mxu0 %v574
  %v1121 = vpop.f32.mrb[0].mxu0
  %v1122 = vpop.f32.mrb[0].mxu0
  %1123 = vdwg.mxu0
  %v1125 = vsel %vm551, %v547, 0
  %1127 = vmatprep.subr.mxu0 0.0
  %1128 = vmatpush1.msra.mxu0 %v550
  %1129 = vmatprep.subr.mxu0 0.0
  %1130 = vmatpush1.msra.mxu0 0.0
  %1131 = vmatprep.subr.mxu0 0.0
  %1132 = vmatpush1.msra.mxu0 0.0
  %1133 = vmatprep.subr.mxu0 0.0
  %1134 = vmatpush1.msra.mxu0 0.0
  %1135 = vmatprep.subr.mxu0 0.0
  %1136 = vmatpush1.msra.mxu0 0.0
  %1137 = vmatprep.subr.mxu0 0.0
  %1138 = vmatpush1.msra.mxu0 0.0
  %1139 = vmatprep.subr.mxu0 0.0
  %1140 = vmatpush1.msra.mxu0 0.0
  %1141 = vmatprep.subr.mxu0 0.0
  %1142 = vmatpush1.msra.mxu0 0.0
  %1143 = vmatprep.subr.mxu0 0.0
  %1144 = vmatpush1.msra.mxu0 0.0
  %1145 = vmatprep.subr.mxu0 0.0
  %1146 = vmatpush1.msra.mxu0 0.0
  %1147 = vmatprep.subr.mxu0 0.0
  %1148 = vmatpush1.msra.mxu0 0.0
  %1149 = vmatprep.subr.mxu0 0.0
  %1150 = vmatpush1.msra.mxu0 0.0
  %1151 = vmatprep.subr.mxu0 0.0
  %1152 = vmatpush1.msra.mxu0 0.0
  %1153 = vmatprep.subr.mxu0 0.0
  %1154 = vmatpush1.msra.mxu0 0.0
  %1155 = vmatprep.subr.mxu0 0.0
  %1156 = vmatpush1.msra.mxu0 0.0
  %1157 = vmatprep.subr.mxu0 0.0
  %1158 = vmatpush1.msra.mxu0 0.0
  %1159 = vmatprep.subr.mxu0 0.0
  %1160 = vmatpush1.msra.mxu0 0.0
  %1161 = vmatprep.subr.mxu0 0.0
  %1162 = vmatpush1.msra.mxu0 0.0
  %1163 = vmatprep.subr.mxu0 0.0
  %1164 = vmatpush1.msra.mxu0 0.0
  %1165 = vmatprep.subr.mxu0 0.0
  %1166 = vmatpush1.msra.mxu0 0.0
  %1167 = vmatprep.subr.mxu0 0.0
  %1168 = vmatpush1.msra.mxu0 0.0
  %1169 = vmatprep.subr.mxu0 0.0
  %1170 = vmatpush1.msra.mxu0 0.0
  %1171 = vmatprep.subr.mxu0 0.0
  %1172 = vmatpush1.msra.mxu0 0.0
  %1173 = vmatprep.subr.mxu0 0.0
  %1174 = vmatpush1.msra.mxu0 0.0
  %1175 = vmatprep.subr.mxu0 0.0
  %1176 = vmatpush1.msra.mxu0 0.0
  %1177 = vmatprep.subr.mxu0 0.0
  %1178 = vmatpush1.msra.mxu0 0.0
  %1179 = vmatprep.subr.mxu0 0.0
  %1180 = vmatpush1.msra.mxu0 0.0
  %1181 = vmatprep.subr.mxu0 0.0
  %1182 = vmatpush1.msra.mxu0 0.0
  %1183 = vmatprep.subr.mxu0 0.0
  %1184 = vmatpush1.msra.mxu0 0.0
  %1185 = vmatprep.subr.mxu0 0.0
  %1186 = vmatpush1.msra.mxu0 0.0
  %1187 = vmatprep.subr.mxu0 0.0
  %1188 = vmatpush1.msra.mxu0 0.0
  %1189 = vmatprep.subr.mxu0 0.0
  %1190 = vmatpush1.msra.mxu0 0.0
  %1191 = vmatprep.mubr.f32.mxu0 0.0
  %1192 = vmatmul.mubr.f32.gmra.mrb[0].mxu0 %v556
  %v1193 = vpop.f32.mrb[0].mxu0
  %v1194 = vadd.f32 0.0, %v1193
  %v1195 = vpop.f32.mrb[0].mxu0
  %1196 = vmatprep.mubr.f32.mxu0 0.0
  %1197 = vmatmul.mubr.f32.gmra.mrb[0].mxu0 %v559
  %v1198 = vpop.f32.mrb[0].mxu0
  %v1199 = vadd.f32 0.0, %v1198
  %v1200 = vpop.f32.mrb[0].mxu0
  %1201 = vmatprep.mubr.f32.mxu0 0.0
  %1202 = vmatmul.mubr.f32.gmra.mrb[0].mxu0 %v562
  %v1203 = vpop.f32.mrb[0].mxu0
  %v1204 = vadd.f32 0.0, %v1203
  %v1205 = vpop.f32.mrb[0].mxu0
  %1206 = vmatprep.mubr.f32.mxu0 0.0
  %1207 = vmatmul.mubr.f32.gmra.mrb[0].mxu0 %v565
  %v1208 = vpop.f32.mrb[0].mxu0
  %v1209 = vadd.f32 0.0, %v1208
  %v1210 = vpop.f32.mrb[0].mxu0
  %1211 = vmatprep.mubr.f32.mxu0 0.0
  %1212 = vmatmul.mubr.f32.gmra.mrb[0].mxu0 %v568
  %v1213 = vpop.f32.mrb[0].mxu0
  %v1214 = vadd.f32 0.0, %v1213
  %v1215 = vpop.f32.mrb[0].mxu0
  %1216 = vmatprep.mubr.f32.mxu0 0.0
  %1217 = vmatmul.mubr.f32.gmra.mrb[0].mxu0 %v571
  %v1218 = vpop.f32.mrb[0].mxu0
  %v1219 = vadd.f32 0.0, %v1218
  %v1220 = vpop.f32.mrb[0].mxu0
  %1221 = vmatprep.mubr.f32.mxu0 0.0
  %1222 = vmatmul.mubr.f32.gmra.mrb[0].mxu0 %v574
  %v1223 = vpop.f32.mrb[0].mxu0
  %v1224 = vpop.f32.mrb[0].mxu0
  %1225 = vmatprep.mubr.f32.mxu0 0.0
  %1226 = vmatmul.mubr.f32.gmra.mrb[0].mxu0 %v1125
  %v1227 = vpop.f32.mrb[0].mxu0
  %v1228 = vpop.f32.mrb[0].mxu0
  %1229 = vdwg.mxu0
  %v1230 = vadd.f32 %v1088, %v1194
  %v1231 = vadd.f32 %v1093, %v1199
  %v1232 = vadd.f32 %v1098, %v1204
  %v1233 = vadd.f32 %v1103, %v1209
  %v1234 = vadd.f32 %v1108, %v1214
  %v1235 = vadd.f32 %v1113, %v1219
  %v1236 = vmax.f32 %v912, %v1230
  %v1237 = vmax.f32 %v913, %v1231
  %v1238 = vmax.f32 %v914, %v1232
  %v1239 = vmax.f32 %v915, %v1233
  %v1240 = vmax.f32 %v916, %v1234
  %v1241 = vmax.f32 %v917, %v1235
  %v1242 = vmax.f32 %v1236, 0.0
  %v1243 = vmax.f32 %v1237, 0.0
  %v1244 = vmax.f32 %v1238, 0.0
  %v1245 = vmax.f32 %v1239, 0.0
  %v1246 = vmax.f32 %v1240, 0.0
  %v1247 = vmax.f32 %v1241, 0.0
  %v1248 = vld [vmem:[%s3] sm:$0xff]
  %v1249 = vld [vmem:[%s3 + $0x8] sm:$0xff]
  %v1250 = vld [vmem:[%s3 + $0x10] sm:$0xff]
  %v1251 = vld [vmem:[%s3 + $0x18] sm:$0xff]
  %v1252 = vld [vmem:[%s3 + $0x20] sm:$0xff]
  %v1253 = vld [vmem:[%s3 + $0x28] sm:$0xff]
  %v1255 = vsel %vm551, %v1243, 0
  %1257 = vmatprep.subr.mxu0 0.0
  %1258 = vmatpush1.msra.mxu0 %v1249
  %1259 = vmatprep.subr.mxu0 0.0
  %1260 = vmatpush1.msra.mxu0 0.0
  %1261 = vmatprep.subr.mxu0 0.0
  %1262 = vmatpush1.msra.mxu0 0.0
  %1263 = vmatprep.subr.mxu0 0.0
  %1264 = vmatpush1.msra.mxu0 0.0
  %1265 = vmatprep.subr.mxu0 0.0
  %1266 = vmatpush1.msra.mxu0 0.0
  %1267 = vmatprep.subr.mxu0 0.0
  %1268 = vmatpush1.msra.mxu0 0.0
  %1269 = vmatprep.subr.mxu0 0.0
  %1270 = vmatpush1.msra.mxu0 0.0
  %1271 = vmatprep.subr.mxu0 0.0
  %1272 = vmatpush1.msra.mxu0 0.0
  %1273 = vmatprep.subr.mxu0 0.0
  %1274 = vmatpush1.msra.mxu0 0.0
  %1275 = vmatprep.subr.mxu0 0.0
  %1276 = vmatpush1.msra.mxu0 0.0
  %1277 = vmatprep.subr.mxu0 0.0
  %1278 = vmatpush1.msra.mxu0 0.0
  %1279 = vmatprep.subr.mxu0 0.0
  %1280 = vmatpush1.msra.mxu0 0.0
  %1281 = vmatprep.subr.mxu0 0.0
  %1282 = vmatpush1.msra.mxu0 0.0
  %1283 = vmatprep.subr.mxu0 0.0
  %1284 = vmatpush1.msra.mxu0 0.0
  %1285 = vmatprep.subr.mxu0 0.0
  %1286 = vmatpush1.msra.mxu0 0.0
  %1287 = vmatprep.subr.mxu0 0.0
  %1288 = vmatpush1.msra.mxu0 0.0
  %1289 = vmatprep.subr.mxu0 0.0
  %1290 = vmatpush1.msra.mxu0 0.0
  %1291 = vmatprep.subr.mxu0 0.0
  %1292 = vmatpush1.msra.mxu0 0.0
  %1293 = vmatprep.subr.mxu0 0.0
  %1294 = vmatpush1.msra.mxu0 0.0
  %1295 = vmatprep.subr.mxu0 0.0
  %1296 = vmatpush1.msra.mxu0 0.0
  %1297 = vmatprep.subr.mxu0 0.0
  %1298 = vmatpush1.msra.mxu0 0.0
  %1299 = vmatprep.subr.mxu0 0.0
  %1300 = vmatpush1.msra.mxu0 0.0
  %1301 = vmatprep.subr.mxu0 0.0
  %1302 = vmatpush1.msra.mxu0 0.0
  %1303 = vmatprep.subr.mxu0 0.0
  %1304 = vmatpush1.msra.mxu0 0.0
  %1305 = vmatprep.subr.mxu0 0.0
  %1306 = vmatpush1.msra.mxu0 0.0
  %1307 = vmatprep.subr.mxu0 0.0
  %1308 = vmatpush1.msra.mxu0 0.0
  %1309 = vmatprep.subr.mxu0 0.0
  %1310 = vmatpush1.msra.mxu0 0.0
  %1311 = vmatprep.subr.mxu0 0.0
  %1312 = vmatpush1.msra.mxu0 0.0
  %1313 = vmatprep.subr.mxu0 0.0
  %1314 = vmatpush1.msra.mxu0 0.0
  %1315 = vmatprep.subr.mxu0 0.0
  %1316 = vmatpush1.msra.mxu0 0.0
  %1317 = vmatprep.subr.mxu0 0.0
  %1318 = vmatpush1.msra.mxu0 0.0
  %1319 = vmatprep.subr.mxu0 0.0
  %1320 = vmatpush1.msra.mxu0 0.0
  %1321 = vmatprep.mubr.f32.mxu0 0.0
  %1322 = vmatmul.mubr.f32.gmra.mrb[0].mxu0 %v1255
  %v1323 = vpop.f32.mrb[0].mxu0
  %v1324 = vadd.f32 0.0, %v1323
  %v1325 = vpop.f32.mrb[0].mxu0
  %1326 = vdwg.mxu0
  %v1328 = vsel %vm551, %v1242, 0
  %1330 = vmatprep.subr.mxu0 0.0
  %1331 = vmatpush1.msra.mxu0 %v1248
  %1332 = vmatprep.subr.mxu0 0.0
  %1333 = vmatpush1.msra.mxu0 0.0
  %1334 = vmatprep.subr.mxu0 0.0
  %1335 = vmatpush1.msra.mxu0 0.0
  %1336 = vmatprep.subr.mxu0 0.0
  %1337 = vmatpush1.msra.mxu0 0.0
  %1338 = vmatprep.subr.mxu0 0.0
  %1339 = vmatpush1.msra.mxu0 0.0
  %1340 = vmatprep.subr.mxu0 0.0
  %1341 = vmatpush1.msra.mxu0 0.0
  %1342 = vmatprep.subr.mxu0 0.0
  %1343 = vmatpush1.msra.mxu0 0.0
  %1344 = vmatprep.subr.mxu0 0.0
  %1345 = vmatpush1.msra.mxu0 0.0
  %1346 = vmatprep.subr.mxu0 0.0
  %1347 = vmatpush1.msra.mxu0 0.0
  %1348 = vmatprep.subr.mxu0 0.0
  %1349 = vmatpush1.msra.mxu0 0.0
  %1350 = vmatprep.subr.mxu0 0.0
  %1351 = vmatpush1.msra.mxu0 0.0
  %1352 = vmatprep.subr.mxu0 0.0
  %1353 = vmatpush1.msra.mxu0 0.0
  %1354 = vmatprep.subr.mxu0 0.0
  %1355 = vmatpush1.msra.mxu0 0.0
  %1356 = vmatprep.subr.mxu0 0.0
  %1357 = vmatpush1.msra.mxu0 0.0
  %1358 = vmatprep.subr.mxu0 0.0
  %1359 = vmatpush1.msra.mxu0 0.0
  %1360 = vmatprep.subr.mxu0 0.0
  %1361 = vmatpush1.msra.mxu0 0.0
  %1362 = vmatprep.subr.mxu0 0.0
  %1363 = vmatpush1.msra.mxu0 0.0
  %1364 = vmatprep.subr.mxu0 0.0
  %1365 = vmatpush1.msra.mxu0 0.0
  %1366 = vmatprep.subr.mxu0 0.0
  %1367 = vmatpush1.msra.mxu0 0.0
  %1368 = vmatprep.subr.mxu0 0.0
  %1369 = vmatpush1.msra.mxu0 0.0
  %1370 = vmatprep.subr.mxu0 0.0
  %1371 = vmatpush1.msra.mxu0 0.0
  %1372 = vmatprep.subr.mxu0 0.0
  %1373 = vmatpush1.msra.mxu0 0.0
  %1374 = vmatprep.subr.mxu0 0.0
  %1375 = vmatpush1.msra.mxu0 0.0
  %1376 = vmatprep.subr.mxu0 0.0
  %1377 = vmatpush1.msra.mxu0 0.0
  %1378 = vmatprep.subr.mxu0 0.0
  %1379 = vmatpush1.msra.mxu0 0.0
  %1380 = vmatprep.subr.mxu0 0.0
  %1381 = vmatpush1.msra.mxu0 0.0
  %1382 = vmatprep.subr.mxu0 0.0
  %1383 = vmatpush1.msra.mxu0 0.0
  %1384 = vmatprep.subr.mxu0 0.0
  %1385 = vmatpush1.msra.mxu0 0.0
  %1386 = vmatprep.subr.mxu0 0.0
  %1387 = vmatpush1.msra.mxu0 0.0
  %1388 = vmatprep.subr.mxu0 0.0
  %1389 = vmatpush1.msra.mxu0 0.0
  %1390 = vmatprep.subr.mxu0 0.0
  %1391 = vmatpush1.msra.mxu0 0.0
  %1392 = vmatprep.subr.mxu0 0.0
  %1393 = vmatpush1.msra.mxu0 0.0
  %1394 = vmatprep.mubr.f32.mxu0 0.0
  %1395 = vmatmul.mubr.f32.gmra.mrb[0].mxu0 %v1328
  %v1396 = vpop.f32.mrb[0].mxu0
  %v1397 = vadd.f32 %v1324, %v1396
  %v1398 = vpop.f32.mrb[0].mxu0
  %1399 = vdwg.mxu0
  %v1401 = vsel %vm551, %v1244, 0
  %1403 = vmatprep.subr.mxu0 0.0
  %1404 = vmatpush1.msra.mxu0 %v1250
  %1405 = vmatprep.subr.mxu0 0.0
  %1406 = vmatpush1.msra.mxu0 0.0
  %1407 = vmatprep.subr.mxu0 0.0
  %1408 = vmatpush1.msra.mxu0 0.0
  %1409 = vmatprep.subr.mxu0 0.0
  %1410 = vmatpush1.msra.mxu0 0.0
  %1411 = vmatprep.subr.mxu0 0.0
  %1412 = vmatpush1.msra.mxu0 0.0
  %1413 = vmatprep.subr.mxu0 0.0
  %1414 = vmatpush1.msra.mxu0 0.0
  %1415 = vmatprep.subr.mxu0 0.0
  %1416 = vmatpush1.msra.mxu0 0.0
  %1417 = vmatprep.subr.mxu0 0.0
  %1418 = vmatpush1.msra.mxu0 0.0
  %1419 = vmatprep.subr.mxu0 0.0
  %1420 = vmatpush1.msra.mxu0 0.0
  %1421 = vmatprep.subr.mxu0 0.0
  %1422 = vmatpush1.msra.mxu0 0.0
  %1423 = vmatprep.subr.mxu0 0.0
  %1424 = vmatpush1.msra.mxu0 0.0
  %1425 = vmatprep.subr.mxu0 0.0
  %1426 = vmatpush1.msra.mxu0 0.0
  %1427 = vmatprep.subr.mxu0 0.0
  %1428 = vmatpush1.msra.mxu0 0.0
  %1429 = vmatprep.subr.mxu0 0.0
  %1430 = vmatpush1.msra.mxu0 0.0
  %1431 = vmatprep.subr.mxu0 0.0
  %1432 = vmatpush1.msra.mxu0 0.0
  %1433 = vmatprep.subr.mxu0 0.0
  %1434 = vmatpush1.msra.mxu0 0.0
  %1435 = vmatprep.subr.mxu0 0.0
  %1436 = vmatpush1.msra.mxu0 0.0
  %1437 = vmatprep.subr.mxu0 0.0
  %1438 = vmatpush1.msra.mxu0 0.0
  %1439 = vmatprep.subr.mxu0 0.0
  %1440 = vmatpush1.msra.mxu0 0.0
  %1441 = vmatprep.subr.mxu0 0.0
  %1442 = vmatpush1.msra.mxu0 0.0
  %1443 = vmatprep.subr.mxu0 0.0
  %1444 = vmatpush1.msra.mxu0 0.0
  %1445 = vmatprep.subr.mxu0 0.0
  %1446 = vmatpush1.msra.mxu0 0.0
  %1447 = vmatprep.subr.mxu0 0.0
  %1448 = vmatpush1.msra.mxu0 0.0
  %1449 = vmatprep.subr.mxu0 0.0
  %1450 = vmatpush1.msra.mxu0 0.0
  %1451 = vmatprep.subr.mxu0 0.0
  %1452 = vmatpush1.msra.mxu0 0.0
  %1453 = vmatprep.subr.mxu0 0.0
  %1454 = vmatpush1.msra.mxu0 0.0
  %1455 = vmatprep.subr.mxu0 0.0
  %1456 = vmatpush1.msra.mxu0 0.0
  %1457 = vmatprep.subr.mxu0 0.0
  %1458 = vmatpush1.msra.mxu0 0.0
  %1459 = vmatprep.subr.mxu0 0.0
  %1460 = vmatpush1.msra.mxu0 0.0
  %1461 = vmatprep.subr.mxu0 0.0
  %1462 = vmatpush1.msra.mxu0 0.0
  %1463 = vmatprep.subr.mxu0 0.0
  %1464 = vmatpush1.msra.mxu0 0.0
  %1465 = vmatprep.subr.mxu0 0.0
  %1466 = vmatpush1.msra.mxu0 0.0
  %1467 = vmatprep.mubr.f32.mxu0 0.0
  %1468 = vmatmul.mubr.f32.gmra.mrb[0].mxu0 %v1401
  %v1469 = vpop.f32.mrb[0].mxu0
  %v1470 = vadd.f32 0.0, %v1469
  %v1471 = vpop.f32.mrb[0].mxu0
  %1472 = vdwg.mxu0
  %v1473 = vadd.f32 %v1397, %v1470
  %v1475 = vsel %vm551, %v1245, 0
  %1477 = vmatprep.subr.mxu0 0.0
  %1478 = vmatpush1.msra.mxu0 %v1251
  %1479 = vmatprep.subr.mxu0 0.0
  %1480 = vmatpush1.msra.mxu0 0.0
  %1481 = vmatprep.subr.mxu0 0.0
  %1482 = vmatpush1.msra.mxu0 0.0
  %1483 = vmatprep.subr.mxu0 0.0
  %1484 = vmatpush1.msra.mxu0 0.0
  %1485 = vmatprep.subr.mxu0 0.0
  %1486 = vmatpush1.msra.mxu0 0.0
  %1487 = vmatprep.subr.mxu0 0.0
  %1488 = vmatpush1.msra.mxu0 0.0
  %1489 = vmatprep.subr.mxu0 0.0
  %1490 = vmatpush1.msra.mxu0 0.0
  %1491 = vmatprep.subr.mxu0 0.0
  %1492 = vmatpush1.msra.mxu0 0.0
  %1493 = vmatprep.subr.mxu0 0.0
  %1494 = vmatpush1.msra.mxu0 0.0
  %1495 = vmatprep.subr.mxu0 0.0
  %1496 = vmatpush1.msra.mxu0 0.0
  %1497 = vmatprep.subr.mxu0 0.0
  %1498 = vmatpush1.msra.mxu0 0.0
  %1499 = vmatprep.subr.mxu0 0.0
  %1500 = vmatpush1.msra.mxu0 0.0
  %1501 = vmatprep.subr.mxu0 0.0
  %1502 = vmatpush1.msra.mxu0 0.0
  %1503 = vmatprep.subr.mxu0 0.0
  %1504 = vmatpush1.msra.mxu0 0.0
  %1505 = vmatprep.subr.mxu0 0.0
  %1506 = vmatpush1.msra.mxu0 0.0
  %1507 = vmatprep.subr.mxu0 0.0
  %1508 = vmatpush1.msra.mxu0 0.0
  %1509 = vmatprep.subr.mxu0 0.0
  %1510 = vmatpush1.msra.mxu0 0.0
  %1511 = vmatprep.subr.mxu0 0.0
  %1512 = vmatpush1.msra.mxu0 0.0
  %1513 = vmatprep.subr.mxu0 0.0
  %1514 = vmatpush1.msra.mxu0 0.0
  %1515 = vmatprep.subr.mxu0 0.0
  %1516 = vmatpush1.msra.mxu0 0.0
  %1517 = vmatprep.subr.mxu0 0.0
  %1518 = vmatpush1.msra.mxu0 0.0
  %1519 = vmatprep.subr.mxu0 0.0
  %1520 = vmatpush1.msra.mxu0 0.0
  %1521 = vmatprep.subr.mxu0 0.0
  %1522 = vmatpush1.msra.mxu0 0.0
  %1523 = vmatprep.subr.mxu0 0.0
  %1524 = vmatpush1.msra.mxu0 0.0
  %1525 = vmatprep.subr.mxu0 0.0
  %1526 = vmatpush1.msra.mxu0 0.0
  %1527 = vmatprep.subr.mxu0 0.0
  %1528 = vmatpush1.msra.mxu0 0.0
  %1529 = vmatprep.subr.mxu0 0.0
  %1530 = vmatpush1.msra.mxu0 0.0
  %1531 = vmatprep.subr.mxu0 0.0
  %1532 = vmatpush1.msra.mxu0 0.0
  %1533 = vmatprep.subr.mxu0 0.0
  %1534 = vmatpush1.msra.mxu0 0.0
  %1535 = vmatprep.subr.mxu0 0.0
  %1536 = vmatpush1.msra.mxu0 0.0
  %1537 = vmatprep.subr.mxu0 0.0
  %1538 = vmatpush1.msra.mxu0 0.0
  %1539 = vmatprep.subr.mxu0 0.0
  %1540 = vmatpush1.msra.mxu0 0.0
  %1541 = vmatprep.mubr.f32.mxu0 0.0
  %1542 = vmatmul.mubr.f32.gmra.mrb[0].mxu0 %v1475
  %v1543 = vpop.f32.mrb[0].mxu0
  %v1544 = vadd.f32 0.0, %v1543
  %v1545 = vpop.f32.mrb[0].mxu0
  %1546 = vdwg.mxu0
  %v1547 = vadd.f32 %v1473, %v1544
  %v1549 = vsel %vm551, %v1246, 0
  %1551 = vmatprep.subr.mxu0 0.0
  %1552 = vmatpush1.msra.mxu0 %v1252
  %1553 = vmatprep.subr.mxu0 0.0
  %1554 = vmatpush1.msra.mxu0 0.0
  %1555 = vmatprep.subr.mxu0 0.0
  %1556 = vmatpush1.msra.mxu0 0.0
  %1557 = vmatprep.subr.mxu0 0.0
  %1558 = vmatpush1.msra.mxu0 0.0
  %1559 = vmatprep.subr.mxu0 0.0
  %1560 = vmatpush1.msra.mxu0 0.0
  %1561 = vmatprep.subr.mxu0 0.0
  %1562 = vmatpush1.msra.mxu0 0.0
  %1563 = vmatprep.subr.mxu0 0.0
  %1564 = vmatpush1.msra.mxu0 0.0
  %1565 = vmatprep.subr.mxu0 0.0
  %1566 = vmatpush1.msra.mxu0 0.0
  %1567 = vmatprep.subr.mxu0 0.0
  %1568 = vmatpush1.msra.mxu0 0.0
  %1569 = vmatprep.subr.mxu0 0.0
  %1570 = vmatpush1.msra.mxu0 0.0
  %1571 = vmatprep.subr.mxu0 0.0
  %1572 = vmatpush1.msra.mxu0 0.0
  %1573 = vmatprep.subr.mxu0 0.0
  %1574 = vmatpush1.msra.mxu0 0.0
  %1575 = vmatprep.subr.mxu0 0.0
  %1576 = vmatpush1.msra.mxu0 0.0
  %1577 = vmatprep.subr.mxu0 0.0
  %1578 = vmatpush1.msra.mxu0 0.0
  %1579 = vmatprep.subr.mxu0 0.0
  %1580 = vmatpush1.msra.mxu0 0.0
  %1581 = vmatprep.subr.mxu0 0.0
  %1582 = vmatpush1.msra.mxu0 0.0
  %1583 = vmatprep.subr.mxu0 0.0
  %1584 = vmatpush1.msra.mxu0 0.0
  %1585 = vmatprep.subr.mxu0 0.0
  %1586 = vmatpush1.msra.mxu0 0.0
  %1587 = vmatprep.subr.mxu0 0.0
  %1588 = vmatpush1.msra.mxu0 0.0
  %1589 = vmatprep.subr.mxu0 0.0
  %1590 = vmatpush1.msra.mxu0 0.0
  %1591 = vmatprep.subr.mxu0 0.0
  %1592 = vmatpush1.msra.mxu0 0.0
  %1593 = vmatprep.subr.mxu0 0.0
  %1594 = vmatpush1.msra.mxu0 0.0
  %1595 = vmatprep.subr.mxu0 0.0
  %1596 = vmatpush1.msra.mxu0 0.0
  %1597 = vmatprep.subr.mxu0 0.0
  %1598 = vmatpush1.msra.mxu0 0.0
  %1599 = vmatprep.subr.mxu0 0.0
  %1600 = vmatpush1.msra.mxu0 0.0
  %1601 = vmatprep.subr.mxu0 0.0
  %1602 = vmatpush1.msra.mxu0 0.0
  %1603 = vmatprep.subr.mxu0 0.0
  %1604 = vmatpush1.msra.mxu0 0.0
  %1605 = vmatprep.subr.mxu0 0.0
  %1606 = vmatpush1.msra.mxu0 0.0
  %1607 = vmatprep.subr.mxu0 0.0
  %1608 = vmatpush1.msra.mxu0 0.0
  %1609 = vmatprep.subr.mxu0 0.0
  %1610 = vmatpush1.msra.mxu0 0.0
  %1611 = vmatprep.subr.mxu0 0.0
  %1612 = vmatpush1.msra.mxu0 0.0
  %1613 = vmatprep.subr.mxu0 0.0
  %1614 = vmatpush1.msra.mxu0 0.0
  %1615 = vmatprep.mubr.f32.mxu0 0.0
  %1616 = vmatmul.mubr.f32.gmra.mrb[0].mxu0 %v1549
  %v1617 = vpop.f32.mrb[0].mxu0
  %v1618 = vadd.f32 0.0, %v1617
  %v1619 = vpop.f32.mrb[0].mxu0
  %1620 = vdwg.mxu0
  %v1621 = vadd.f32 %v1547, %v1618
  %v1623 = vsel %vm551, %v1247, 0
  %1625 = vmatprep.subr.mxu0 0.0
  %1626 = vmatpush1.msra.mxu0 %v1253
  %1627 = vmatprep.subr.mxu0 0.0
  %1628 = vmatpush1.msra.mxu0 0.0
  %1629 = vmatprep.subr.mxu0 0.0
  %1630 = vmatpush1.msra.mxu0 0.0
  %1631 = vmatprep.subr.mxu0 0.0
  %1632 = vmatpush1.msra.mxu0 0.0
  %1633 = vmatprep.subr.mxu0 0.0
  %1634 = vmatpush1.msra.mxu0 0.0
  %1635 = vmatprep.subr.mxu0 0.0
  %1636 = vmatpush1.msra.mxu0 0.0
  %1637 = vmatprep.subr.mxu0 0.0
  %1638 = vmatpush1.msra.mxu0 0.0
  %1639 = vmatprep.subr.mxu0 0.0
  %1640 = vmatpush1.msra.mxu0 0.0
  %1641 = vmatprep.subr.mxu0 0.0
  %1642 = vmatpush1.msra.mxu0 0.0
  %1643 = vmatprep.subr.mxu0 0.0
  %1644 = vmatpush1.msra.mxu0 0.0
  %1645 = vmatprep.subr.mxu0 0.0
  %1646 = vmatpush1.msra.mxu0 0.0
  %1647 = vmatprep.subr.mxu0 0.0
  %1648 = vmatpush1.msra.mxu0 0.0
  %1649 = vmatprep.subr.mxu0 0.0
  %1650 = vmatpush1.msra.mxu0 0.0
  %1651 = vmatprep.subr.mxu0 0.0
  %1652 = vmatpush1.msra.mxu0 0.0
  %1653 = vmatprep.subr.mxu0 0.0
  %1654 = vmatpush1.msra.mxu0 0.0
  %1655 = vmatprep.subr.mxu0 0.0
  %1656 = vmatpush1.msra.mxu0 0.0
  %1657 = vmatprep.subr.mxu0 0.0
  %1658 = vmatpush1.msra.mxu0 0.0
  %1659 = vmatprep.subr.mxu0 0.0
  %1660 = vmatpush1.msra.mxu0 0.0
  %1661 = vmatprep.subr.mxu0 0.0
  %1662 = vmatpush1.msra.mxu0 0.0
  %1663 = vmatprep.subr.mxu0 0.0
  %1664 = vmatpush1.msra.mxu0 0.0
  %1665 = vmatprep.subr.mxu0 0.0
  %1666 = vmatpush1.msra.mxu0 0.0
  %1667 = vmatprep.subr.mxu0 0.0
  %1668 = vmatpush1.msra.mxu0 0.0
  %1669 = vmatprep.subr.mxu0 0.0
  %1670 = vmatpush1.msra.mxu0 0.0
  %1671 = vmatprep.subr.mxu0 0.0
  %1672 = vmatpush1.msra.mxu0 0.0
  %1673 = vmatprep.subr.mxu0 0.0
  %1674 = vmatpush1.msra.mxu0 0.0
  %1675 = vmatprep.subr.mxu0 0.0
  %1676 = vmatpush1.msra.mxu0 0.0
  %1677 = vmatprep.subr.mxu0 0.0
  %1678 = vmatpush1.msra.mxu0 0.0
  %1679 = vmatprep.subr.mxu0 0.0
  %1680 = vmatpush1.msra.mxu0 0.0
  %1681 = vmatprep.subr.mxu0 0.0
  %1682 = vmatpush1.msra.mxu0 0.0
  %1683 = vmatprep.subr.mxu0 0.0
  %1684 = vmatpush1.msra.mxu0 0.0
  %1685 = vmatprep.subr.mxu0 0.0
  %1686 = vmatpush1.msra.mxu0 0.0
  %1687 = vmatprep.subr.mxu0 0.0
  %1688 = vmatpush1.msra.mxu0 0.0
  %1689 = vmatprep.mubr.f32.mxu0 0.0
  %1690 = vmatmul.mubr.f32.gmra.mrb[0].mxu0 %v1623
  %v1691 = vpop.f32.mrb[0].mxu0
  %v1692 = vadd.f32 0.0, %v1691
  %v1693 = vpop.f32.mrb[0].mxu0
  %1694 = vdwg.mxu0
  %v1695 = vadd.f32 %v1621, %v1692
  %v1696 = vmax.f32 %v1695, 0.0
  %v1697 = vld [vmem:[%s4] sm:$0xff]
  %v1698 = vld [vmem:[%s4 + $0x8] sm:$0xff]
  %v1699 = vld [vmem:[%s4 + $0x10] sm:$0xff]
  %v1700 = vld [vmem:[%s4 + $0x18] sm:$0xff]
  %vm1701 = vcmask 261120
  %v1703 = vsel %vm1701, %v1696, 0
  %1705 = vmatprep.subr.mxu0 0.0
  %1706 = vmatpush1.msra.mxu0 %v1697
  %1707 = vmatprep.subr.mxu0 0.0
  %1708 = vmatpush1.msra.mxu0 %v1698
  %1709 = vmatprep.subr.mxu0 0.0
  %1710 = vmatpush1.msra.mxu0 %v1699
  %1711 = vmatprep.subr.mxu0 0.0
  %1712 = vmatpush1.msra.mxu0 %v1700
  %1713 = vmatprep.subr.mxu0 0.0
  %1714 = vmatpush1.msra.mxu0 0.0
  %1715 = vmatprep.subr.mxu0 0.0
  %1716 = vmatpush1.msra.mxu0 0.0
  %1717 = vmatprep.subr.mxu0 0.0
  %1718 = vmatpush1.msra.mxu0 0.0
  %1719 = vmatprep.subr.mxu0 0.0
  %1720 = vmatpush1.msra.mxu0 0.0
  %1721 = vmatprep.subr.mxu0 0.0
  %1722 = vmatpush1.msra.mxu0 0.0
  %1723 = vmatprep.subr.mxu0 0.0
  %1724 = vmatpush1.msra.mxu0 0.0
  %1725 = vmatprep.subr.mxu0 0.0
  %1726 = vmatpush1.msra.mxu0 0.0
  %1727 = vmatprep.subr.mxu0 0.0
  %1728 = vmatpush1.msra.mxu0 0.0
  %1729 = vmatprep.subr.mxu0 0.0
  %1730 = vmatpush1.msra.mxu0 0.0
  %1731 = vmatprep.subr.mxu0 0.0
  %1732 = vmatpush1.msra.mxu0 0.0
  %1733 = vmatprep.subr.mxu0 0.0
  %1734 = vmatpush1.msra.mxu0 0.0
  %1735 = vmatprep.subr.mxu0 0.0
  %1736 = vmatpush1.msra.mxu0 0.0
  %1737 = vmatprep.subr.mxu0 0.0
  %1738 = vmatpush1.msra.mxu0 0.0
  %1739 = vmatprep.subr.mxu0 0.0
  %1740 = vmatpush1.msra.mxu0 0.0
  %1741 = vmatprep.subr.mxu0 0.0
  %1742 = vmatpush1.msra.mxu0 0.0
  %1743 = vmatprep.subr.mxu0 0.0
  %1744 = vmatpush1.msra.mxu0 0.0
  %1745 = vmatprep.subr.mxu0 0.0
  %1746 = vmatpush1.msra.mxu0 0.0
  %1747 = vmatprep.subr.mxu0 0.0
  %1748 = vmatpush1.msra.mxu0 0.0
  %1749 = vmatprep.subr.mxu0 0.0
  %1750 = vmatpush1.msra.mxu0 0.0
  %1751 = vmatprep.subr.mxu0 0.0
  %1752 = vmatpush1.msra.mxu0 0.0
  %1753 = vmatprep.subr.mxu0 0.0
  %1754 = vmatpush1.msra.mxu0 0.0
  %1755 = vmatprep.subr.mxu0 0.0
  %1756 = vmatpush1.msra.mxu0 0.0
  %1757 = vmatprep.subr.mxu0 0.0
  %1758 = vmatpush1.msra.mxu0 0.0
  %1759 = vmatprep.subr.mxu0 0.0
  %1760 = vmatpush1.msra.mxu0 0.0
  %1761 = vmatprep.subr.mxu0 0.0
  %1762 = vmatpush1.msra.mxu0 0.0
  %1763 = vmatprep.subr.mxu0 0.0
  %1764 = vmatpush1.msra.mxu0 0.0
  %1765 = vmatprep.subr.mxu0 0.0
  %1766 = vmatpush1.msra.mxu0 0.0
  %1767 = vmatprep.subr.mxu0 0.0
  %1768 = vmatpush1.msra.mxu0 0.0
  %1769 = vmatprep.mubr.f32.mxu0 0.0
  %1770 = vmatmul.mubr.f32.gmra.mrb[0].mxu0 %v1703
  %v1771 = vpop.f32.mrb[0].mxu0
  %v1772 = vadd.f32 0.0, %v1771
  %v1773 = vpop.f32.mrb[0].mxu0
  %1774 = vdwg.mxu0
  %1775 = vst [vmem:[%s5] sm:$0xff] %v1772
  // Predicated region
  $region22: #{net_forward.1} parent=0 // pred_check
    _
  $region23: #{net_forward.1} parent=0 // pred_check_branch
    %1777 = sbr.rel (0) target = $region25
  $region24: #{net_forward.1} parent=0 // pred_region
    _
  $region25: #{net_forward.1} parent=0 // pred_fallthru
    _
  // Predicated region
  $region26: #{net_forward.1} parent=0 // pred_check
    _
  $region27: #{net_forward.1} parent=0 // pred_check_branch
    %1779 = sbr.rel (0) target = $region29
  $region28: #{net_forward.1} parent=0 // pred_region
    _
  $region29: #{net_forward.1} parent=0 // pred_fallthru
    _

</llo_original>
